<compile_context>
chip_gen: v7x
topology: tpu7x:2x2x1
jax: 0.10.0
libtpu: 0.0.40
codegen_flags: <defaults>
</compile_context>

<pallas_src>
import functools
import math

import jax
import jax.numpy as jnp
from jax.experimental import pallas as pl
from jax.experimental.pallas import tpu as pltpu


def _round_up(x, m):
    return ((x + m - 1) // m) * m


# ----------------------------------------------------------------------------
# 1) Multi-head self-attention + residual + LayerNorm1 (one batch element / step)
# ----------------------------------------------------------------------------
def _mha_ln_kernel(x_ref, mb_ref, wqkv_ref, bqkv_ref, wo_ref, bo_ref,
                   g_ref, bln_ref, o_ref, osc_ref, *, n_heads, eps, cdt):
    x = x_ref[0]                                   # (S, H), input dtype (f32)
    S, H = x.shape
    dh = H // n_heads
    scale = 1.0 / math.sqrt(dh)

    # Fused QKV projection: one (S,H)@(H,3H) MXU dot, f32 accumulation.
    qkv = jnp.dot(x.astype(cdt), wqkv_ref[...],
                  preferred_element_type=jnp.float32) + bqkv_ref[...]   # (S, 3H) f32

    mb = mb_ref[0]                                 # (1, S) additive key-padding bias

    for h in range(n_heads):                       # static unroll over heads
        lo = h * dh
        qh = qkv[:, lo:lo + dh].astype(cdt)
        kh = qkv[:, H + lo:H + lo + dh].astype(cdt)
        vh = qkv[:, 2 * H + lo:2 * H + lo + dh].astype(cdt)
        # (S,dh) x (S,dh) contracted on last dim -> (S,S); no explicit .T relayout.
        s = jax.lax.dot_general(qh, kh, (((1,), (1,)), ((), ())),
                                preferred_element_type=jnp.float32)
        s = s * scale + mb
        s = s - jnp.max(s, axis=-1, keepdims=True)
        p = jnp.exp(s)
        p = p * pl.reciprocal(jnp.sum(p, axis=-1, keepdims=True), approx=True)
        # TODO(synk): attention-weight dropout (training mode) not implemented.
        oh = jnp.dot(p.astype(cdt), vh, preferred_element_type=jnp.float32)   # (S, dh)
        osc_ref[:, lo:lo + dh] = oh                # collect heads in VMEM scratch

    # Single full-contraction output projection.
    attn = jnp.dot(osc_ref[...].astype(cdt), wo_ref[...],
                   preferred_element_type=jnp.float32) + bo_ref[...]          # (S, H)

    # Fused residual-add + LayerNorm1 epilogue (dropout: eval identity).
    ssum = x.astype(jnp.float32) + attn
    mu = jnp.mean(ssum, axis=-1, keepdims=True)
    c = ssum - mu
    var = jnp.mean(c * c, axis=-1, keepdims=True)
    inv = jax.lax.rsqrt(var + eps)
    o_ref[0] = (c * inv * g_ref[...] + bln_ref[...]).astype(o_ref.dtype)


def multihead_self_attention_ln(x, key_padding_mask, wqkv, bqkv, wo, bo, ln_g, ln_b,
                                *, n_heads, compute_dtype=None, eps=1e-5,
                                vmem_limit_bytes=48 * 1024 * 1024):
    """x: [B,S,H]  key_padding_mask: [B,S] bool (True = pad)
       wqkv: [H,3H]  bqkv: [3H]  wo: [H,H]  bo/ln_g/ln_b: [H]"""
    B, S, H = x.shape
    assert H % n_heads == 0
    cdt = x.dtype if compute_dtype is None else compute_dtype
    itemsize = jnp.dtype(cdt).itemsize

    # Pad S to a sublane multiple (padded keys get -1e9 bias, padded query rows
    # are sliced off).  For long S, padding to 128 gives fully lane-dense scores.
    S_pad = _round_up(S, 8)
    mask = key_padding_mask
    if S_pad != S:
        x = jnp.pad(x, ((0, 0), (0, S_pad - S), (0, 0)))
        mask = jnp.pad(mask, ((0, 0), (0, S_pad - S)), constant_values=True)
    mb3 = jnp.where(mask, -1e9, 0.0).astype(jnp.float32).reshape(B, 1, S_pad)

    wqkvc = wqkv.astype(cdt)
    woc = wo.astype(cdt)
    bqkv2 = bqkv.reshape(1, 3 * H).astype(jnp.float32)
    bo2 = bo.reshape(1, H).astype(jnp.float32)
    g2 = ln_g.reshape(1, H).astype(jnp.float32)
    b2 = ln_b.reshape(1, H).astype(jnp.float32)

    flops = B * (8 * S_pad * H * H + 4 * S_pad * S_pad * H)
    bytes_accessed = (2 * B * S_pad * H * 4 + 4 * H * H * itemsize
                      + (3 * H + 3 * H) * 4)
    cost = pl.CostEstimate(flops=int(flops),
                           transcendentals=int(B * n_heads * S_pad * S_pad),
                           bytes_accessed=int(bytes_accessed))

    kernel = functools.partial(_mha_ln_kernel, n_heads=n_heads, eps=eps, cdt=cdt)
    out = pl.pallas_call(
        kernel,
        out_shape=jax.ShapeDtypeStruct((B, S_pad, H), x.dtype),
        grid=(B,),
        in_specs=[
            pl.BlockSpec((1, S_pad, H), lambda b: (b, 0, 0)),   # x (f32, also residual)
            pl.BlockSpec((1, 1, S_pad), lambda b: (b, 0, 0)),   # mask bias
            pl.BlockSpec((H, 3 * H), lambda b: (0, 0)),         # fused Wqkv
            pl.BlockSpec((1, 3 * H), lambda b: (0, 0)),         # fused bqkv
            pl.BlockSpec((H, H), lambda b: (0, 0)),             # Wo
            pl.BlockSpec((1, H), lambda b: (0, 0)),             # bo
            pl.BlockSpec((1, H), lambda b: (0, 0)),             # ln1 gamma
            pl.BlockSpec((1, H), lambda b: (0, 0)),             # ln1 beta
        ],
        out_specs=pl.BlockSpec((1, S_pad, H), lambda b: (b, 0, 0)),
        scratch_shapes=[pltpu.VMEM((S_pad, H), jnp.float32)],   # head-output collector
        compiler_params=pltpu.CompilerParams(
            dimension_semantics=("parallel",),
            vmem_limit_bytes=vmem_limit_bytes),
        cost_estimate=cost,
    )(x, mb3, wqkvc, bqkv2, woc, bo2, g2, b2)
    return out[:, :S]


# ----------------------------------------------------------------------------
# 2) Positionwise FFN + residual + LayerNorm2: row tile (parallel) x PF tile (reduction)
# ----------------------------------------------------------------------------
def _ffn_ln_kernel(x_ref, w1_ref, b1_ref, w2_ref, b2_ref, g_ref, bln_ref,
                   o_ref, acc_ref, *, eps, cdt):
    k = pl.program_id(1)

    @pl.when(k == 0)
    def _():
        acc_ref[...] = jnp.zeros_like(acc_ref)

    h = jnp.dot(x_ref[...].astype(cdt), w1_ref[...],
                preferred_element_type=jnp.float32) + b1_ref[...]
    h = jnp.maximum(h, 0.0)                        # relu
    # TODO(synk): training-mode dropout would be applied to h here; eval identity.
    acc_ref[...] += jnp.dot(h.astype(cdt), w2_ref[...],
                            preferred_element_type=jnp.float32)

    @pl.when(k == pl.num_programs(1) - 1)
    def _():
        # Fused residual-add + LayerNorm2 epilogue (dropout: eval identity).
        s = x_ref[...].astype(jnp.float32) + acc_ref[...] + b2_ref[...]
        mu = jnp.mean(s, axis=-1, keepdims=True)
        c = s - mu
        var = jnp.mean(c * c, axis=-1, keepdims=True)
        inv = jax.lax.rsqrt(var + eps)
        o_ref[...] = (c * inv * g_ref[...] + bln_ref[...]).astype(o_ref.dtype)


def positionwise_feedforward_ln(x, w1, b1, w2, b2, ln_g, ln_b, *, tm=512, tpf=None,
                                compute_dtype=jnp.bfloat16, eps=1e-5,
                                vmem_limit_bytes=48 * 1024 * 1024):
    """x: [B,S,H]  w1: [H,PF]  b1: [PF]  w2: [PF,H]  b2/ln_g/ln_b: [H]"""
    B, S, H = x.shape
    PF = w1.shape[1]
    # Lane-dense feature dims (avoid masked vst.msk partial stores).
    assert H % 128 == 0 and PF % 128 == 0, "H and PF must be multiples of 128"

    out_dtype = x.dtype
    cdt = x.dtype if compute_dtype is None else compute_dtype
    itemsize = jnp.dtype(cdt).itemsize

    M = B * S
    tm = max(8, min(tm, _round_up(M, 8)))
    tm = _round_up(tm, 8)
    M_pad = _round_up(M, tm)                       # pad rows instead of asserting divisibility

    # PF-slab size: keep both weights VMEM-resident (tpf = PF, constant index maps ->
    # fetched once) when the double-buffered pair fits comfortably; else slab the
    # reduction so per-slab weight buffers stay small (v7x 64 MiB safe).
    if tpf is None:
        w_resident_bytes = 2 * (2 * H * PF * itemsize)     # both weights, double-buffered
        tpf = PF if w_resident_bytes <= 24 * 1024 * 1024 else 512
    tpf = max(128, (min(tpf, PF) // 128) * 128)
    while PF % tpf:
        tpf -= 128

    x2 = x.reshape(M, H)                           # keep f32 for the residual/LN path
    if M_pad != M:
        x2 = jnp.pad(x2, ((0, M_pad - M), (0, 0)))
    w1c = w1.astype(cdt)
    w2c = w2.astype(cdt)
    b1_2 = b1.reshape(1, PF).astype(jnp.float32)
    b2_2 = b2.reshape(1, H).astype(jnp.float32)
    g2 = ln_g.reshape(1, H).astype(jnp.float32)
    bln2 = ln_b.reshape(1, H).astype(jnp.float32)

    n_row = M_pad // tm
    w_stream = 1 if tpf == PF else n_row           # weight re-stream factor
    flops = 4 * M_pad * H * PF
    bytes_accessed = (2 * M_pad * H * 4
                      + 2 * H * PF * itemsize * w_stream
                      + (PF + 3 * H) * 4)
    cost = pl.CostEstimate(flops=int(flops), transcendentals=0,
                           bytes_accessed=int(bytes_accessed))

    out = pl.pallas_call(
        functools.partial(_ffn_ln_kernel, eps=eps, cdt=cdt),
        out_shape=jax.ShapeDtypeStruct((M_pad, H), out_dtype),
        grid=(n_row, PF // tpf),
        in_specs=[
            pl.BlockSpec((tm, H), lambda i, k: (i, 0)),    # x rows (matmul input + residual)
            pl.BlockSpec((H, tpf), lambda i, k: (0, k)),   # W1 PF-slab
            pl.BlockSpec((1, tpf), lambda i, k: (0, k)),   # b1 PF-slab
            pl.BlockSpec((tpf, H), lambda i, k: (k, 0)),   # W2 PF-slab
            pl.BlockSpec((1, H), lambda i, k: (0, 0)),     # b2
            pl.BlockSpec((1, H), lambda i, k: (0, 0)),     # ln2 gamma
            pl.BlockSpec((1, H), lambda i, k: (0, 0)),     # ln2 beta
        ],
        out_specs=pl.BlockSpec((tm, H), lambda i, k: (i, 0)),
        scratch_shapes=[pltpu.VMEM((tm, H), jnp.float32)],
        compiler_params=pltpu.CompilerParams(
            dimension_semantics=("parallel", "arbitrary"),
            vmem_limit_bytes=vmem_limit_bytes),
        cost_estimate=cost,
    )(x2, w1c, b1_2, w2c, b2_2, g2, bln2)

    return out[:M].reshape(B, S, H)


# ----------------------------------------------------------------------------
# Full encoder layer (eval mode)
# ----------------------------------------------------------------------------
def encoder_layer(src, key_padding_mask, p, *, n_heads, tm=512, tpf=None,
                  compute_dtype=jnp.bfloat16):
    wqkv = jnp.concatenate([p["wq"], p["wk"], p["wv"]], axis=1)   # (H, 3H)
    bqkv = jnp.concatenate([p["bq"], p["bk"], p["bv"]], axis=0)   # (3H,)
    x = multihead_self_attention_ln(src, key_padding_mask, wqkv, bqkv,
                                    p["wo"], p["bo"], p["ln1_g"], p["ln1_b"],
                                    n_heads=n_heads, compute_dtype=compute_dtype)
    return positionwise_feedforward_ln(x, p["w1"], p["fb1"], p["w2"], p["fb2"],
                                       p["ln2_g"], p["ln2_b"], tm=tm, tpf=tpf,
                                       compute_dtype=compute_dtype)


# ----------------------------------------------------------------------------
# Pure-JAX reference
# ----------------------------------------------------------------------------
def _layer_norm_ref(x, g, b, eps=1e-5):
    mu = jnp.mean(x, axis=-1, keepdims=True)
    var = jnp.mean((x - mu) ** 2, axis=-1, keepdims=True)
    return (x - mu) * jax.lax.rsqrt(var + eps) * g + b


def _mha_ref(x, mask_bias, p, n_heads):
    B, S, H = x.shape
    dh = H // n_heads

    def split(t):
        return t.reshape(B, S, n_heads, dh).transpose(0, 2, 1, 3)

    q = split(x @ p["wq"] + p["bq"])
    k = split(x @ p["wk"] + p["bk"])
    v = split(x @ p["wv"] + p["bv"])
    s = jnp.einsum("bhqd,bhkd->bhqk", q, k) / math.sqrt(dh)
    s = s + mask_bias[:, None, None, :]
    w = jax.nn.softmax(s, axis=-1)
    o = jnp.einsum("bhqk,bhkd->bhqd", w, v).transpose(0, 2, 1, 3).reshape(B, S, H)
    return o @ p["wo"] + p["bo"]


def _encoder_layer_ref(src, mask_bias, p, n_heads):
    attn = _mha_ref(src, mask_bias, p, n_heads)
    x = _layer_norm_ref(src + attn, p["ln1_g"], p["ln1_b"])
    ff = jnp.maximum(x @ p["w1"] + p["fb1"], 0.0) @ p["w2"] + p["fb2"]
    return _layer_norm_ref(x + ff, p["ln2_g"], p["ln2_b"])


def _init_linear(key, in_dim, out_dim, dtype=jnp.float32):
    kw, kb = jax.random.split(key)
    bound = 1.0 / math.sqrt(in_dim)
    w = jax.random.uniform(kw, (in_dim, out_dim), dtype, -bound, bound)
    b = jax.random.uniform(kb, (out_dim,), dtype, -bound, bound)
    return w, b


if __name__ == "__main__":
    key = jax.random.PRNGKey(0)
    keys = jax.random.split(key, 12)

    batch, seq, hid_dim, pf_dim, n_heads = 2, 16, 128, 256, 4

    src = jax.random.normal(keys[0], (batch, seq, hid_dim), jnp.float32)
    lengths = jnp.array([seq, seq - 5])
    key_padding_mask = jnp.arange(seq)[None, :] >= lengths[:, None]   # True = padding

    p = {}
    p["wq"], p["bq"] = _init_linear(keys[1], hid_dim, hid_dim)
    p["wk"], p["bk"] = _init_linear(keys[2], hid_dim, hid_dim)
    p["wv"], p["bv"] = _init_linear(keys[3], hid_dim, hid_dim)
    p["wo"], p["bo"] = _init_linear(keys[4], hid_dim, hid_dim)
    p["ln1_g"] = 1.0 + 0.1 * jax.random.normal(keys[5], (hid_dim,), jnp.float32)
    p["ln1_b"] = 0.1 * jax.random.normal(keys[6], (hid_dim,), jnp.float32)
    p["w1"], p["fb1"] = _init_linear(keys[7], hid_dim, pf_dim)
    p["w2"], p["fb2"] = _init_linear(keys[8], pf_dim, hid_dim)
    p["ln2_g"] = 1.0 + 0.1 * jax.random.normal(keys[9], (hid_dim,), jnp.float32)
    p["ln2_b"] = 0.1 * jax.random.normal(keys[10], (hid_dim,), jnp.float32)

    mask_bias = jnp.where(key_padding_mask, -1e9, 0.0).astype(jnp.float32)
    with jax.default_matmul_precision("float32"):
        ref = _encoder_layer_ref(src, mask_bias, p, n_heads)

    # f32-operand path: tight check against the fp32 reference.
    y32 = encoder_layer(src, key_padding_mask, p, n_heads=n_heads,
                        compute_dtype=jnp.float32)
    jax.block_until_ready(y32)
    assert y32.shape == (batch, seq, hid_dim)
    err32 = float(jnp.max(jnp.abs(y32 - ref)))
    assert err32 < 2e-2, f"encoder layer (f32) mismatch: max abs err {err32}"

    # Default bf16-operand / f32-accumulate path (perf-review default): loose tolerance.
    ybf = encoder_layer(src, key_padding_mask, p, n_heads=n_heads)
    jax.block_until_ready(ybf)
    errbf = float(jnp.max(jnp.abs(ybf - ref)))
    assert errbf < 1.5e-1, f"encoder layer (bf16) mismatch: max abs err {errbf}"

    print("KERNEL_OK")
</pallas_src>

<mosaic_0001>
module attributes {stable_mosaic.version = 11 : i64} {
  func.func @_mha_ln_kernel(%arg0: i32, %arg1: memref<1x16x128xf32, #tpu.memory_space<vmem>>, %arg2: memref<1x1x16xf32, #tpu.memory_space<vmem>>, %arg3: memref<128x384xf32, #tpu.memory_space<vmem>>, %arg4: memref<1x384xf32, #tpu.memory_space<vmem>>, %arg5: memref<128x128xf32, #tpu.memory_space<vmem>>, %arg6: memref<1x128xf32, #tpu.memory_space<vmem>>, %arg7: memref<1x128xf32, #tpu.memory_space<vmem>>, %arg8: memref<1x128xf32, #tpu.memory_space<vmem>>, %arg9: memref<1x16x128xf32, #tpu.memory_space<vmem>>, %arg10: memref<16x128xf32, #tpu.memory_space<vmem>>) attributes {dimension_semantics = [#tpu.dimension_semantics<parallel>], iteration_bounds = array<i64: 2>, scalar_prefetch = 0 : i64, scratch_operands = 1 : i64, tpu.core_type = #tpu.core_type<tc>, window_params = [{transform_indices = @transform_0, window_bounds = array<i64: 1, 16, 128>}, {transform_indices = @transform_1, window_bounds = array<i64: 1, 1, 16>}, {pipeline_mode = #tpu.pipeline_mode<synchronous>, transform_indices = @transform_2, window_bounds = array<i64: 128, 384>}, {pipeline_mode = #tpu.pipeline_mode<synchronous>, transform_indices = @transform_3, window_bounds = array<i64: 1, 384>}, {pipeline_mode = #tpu.pipeline_mode<synchronous>, transform_indices = @transform_4, window_bounds = array<i64: 128, 128>}, {pipeline_mode = #tpu.pipeline_mode<synchronous>, transform_indices = @transform_5, window_bounds = array<i64: 1, 128>}, {pipeline_mode = #tpu.pipeline_mode<synchronous>, transform_indices = @transform_6, window_bounds = array<i64: 1, 128>}, {pipeline_mode = #tpu.pipeline_mode<synchronous>, transform_indices = @transform_7, window_bounds = array<i64: 1, 128>}, {transform_indices = @transform_8, window_bounds = array<i64: 1, 16, 128>}]} {
    %c0 = arith.constant 0 : index
    %c0_0 = arith.constant 0 : index
    %c0_1 = arith.constant 0 : index
    %0 = vector.load %arg1[%c0, %c0_0, %c0_1] : memref<1x16x128xf32, #tpu.memory_space<vmem>>, vector<1x16x128xf32>
    %1 = vector.shape_cast %0 : vector<1x16x128xf32> to vector<16x128xf32>
    %c0_2 = arith.constant 0 : index
    %c0_3 = arith.constant 0 : index
    %2 = vector.load %arg3[%c0_2, %c0_3] : memref<128x384xf32, #tpu.memory_space<vmem>>, vector<128x384xf32>
    %cst = arith.constant dense<0.000000e+00> : vector<16x384xf32>
    %3 = tpu.matmul %1, %2, %cst {dimension_numbers = #tpu.dot_dimension_numbers<[1], [0], [0], [1], [0, 0, 1, 1], [], []>} : vector<16x128xf32>, vector<128x384xf32>, vector<16x384xf32> -> vector<16x384xf32>
    %c0_4 = arith.constant 0 : index
    %c0_5 = arith.constant 0 : index
    %4 = vector.load %arg4[%c0_4, %c0_5] : memref<1x384xf32, #tpu.memory_space<vmem>>, vector<1x384xf32>
    %5 = vector.broadcast %4 : vector<1x384xf32> to vector<16x384xf32>
    %6 = arith.addf %3, %5 : vector<16x384xf32>
    %c0_6 = arith.constant 0 : index
    %c0_7 = arith.constant 0 : index
    %c0_8 = arith.constant 0 : index
    %7 = vector.load %arg2[%c0_6, %c0_7, %c0_8] : memref<1x1x16xf32, #tpu.memory_space<vmem>>, vector<1x1x16xf32>
    %8 = vector.shape_cast %7 : vector<1x1x16xf32> to vector<1x16xf32>
    %9 = vector.extract_strided_slice %6 {offsets = [0, 0], sizes = [16, 32], strides = [1, 1]} : vector<16x384xf32> to vector<16x32xf32>
    %10 = vector.extract_strided_slice %6 {offsets = [0, 128], sizes = [16, 32], strides = [1, 1]} : vector<16x384xf32> to vector<16x32xf32>
    %11 = vector.extract_strided_slice %6 {offsets = [0, 256], sizes = [16, 32], strides = [1, 1]} : vector<16x384xf32> to vector<16x32xf32>
    %cst_9 = arith.constant dense<0.000000e+00> : vector<16x16xf32>
    %12 = tpu.matmul %9, %10, %cst_9 {dimension_numbers = #tpu.dot_dimension_numbers<[1], [1], [0], [0], [0, 0, 1, 0], [], []>} : vector<16x32xf32>, vector<16x32xf32>, vector<16x16xf32> -> vector<16x16xf32>
    %cst_10 = arith.constant 0.176776692 : f32
    %13 = vector.broadcast %cst_10 : f32 to vector<16x16xf32>
    %14 = arith.mulf %12, %13 : vector<16x16xf32>
    %15 = vector.broadcast %8 : vector<1x16xf32> to vector<16x16xf32>
    %16 = arith.addf %14, %15 : vector<16x16xf32>
    %cst_11 = arith.constant dense<0xFF800000> : vector<16xf32>
    %17 = vector.multi_reduction <maximumf>, %16, %cst_11 [1] : vector<16x16xf32> to vector<16xf32>
    %18 = vector.shape_cast %17 : vector<16xf32> to vector<16x1xf32>
    %19 = vector.broadcast %18 : vector<16x1xf32> to vector<16x16xf32>
    %20 = arith.subf %16, %19 : vector<16x16xf32>
    %21 = math.exp %20 : vector<16x16xf32>
    %cst_12 = arith.constant dense<0.000000e+00> : vector<16xf32>
    %22 = vector.multi_reduction <add>, %21, %cst_12 [1] : vector<16x16xf32> to vector<16xf32>
    %23 = vector.shape_cast %22 : vector<16xf32> to vector<16x1xf32>
    %24 = tpu.reciprocal %23 {approx = true} : vector<16x1xf32> -> vector<16x1xf32>
    %25 = vector.broadcast %24 : vector<16x1xf32> to vector<16x16xf32>
    %26 = arith.mulf %21, %25 : vector<16x16xf32>
    %cst_13 = arith.constant dense<0.000000e+00> : vector<16x32xf32>
    %27 = tpu.matmul %26, %11, %cst_13 {dimension_numbers = #tpu.dot_dimension_numbers<[1], [0], [0], [1], [0, 0, 1, 1], [], []>} : vector<16x16xf32>, vector<16x32xf32>, vector<16x32xf32> -> vector<16x32xf32>
    %c0_14 = arith.constant 0 : index
    %c0_15 = arith.constant 0 : index
    %28 = vector.load %arg10[%c0_14, %c0_15] : memref<16x128xf32, #tpu.memory_space<vmem>>, vector<16x32xf32>
    tpu.vector_store %arg10[%c0_14, %c0_15], %27 {strides = array<i32>} : memref<16x128xf32, #tpu.memory_space<vmem>>, vector<16x32xf32>,
    %29 = vector.extract_strided_slice %6 {offsets = [0, 32], sizes = [16, 32], strides = [1, 1]} : vector<16x384xf32> to vector<16x32xf32>
    %30 = vector.extract_strided_slice %6 {offsets = [0, 160], sizes = [16, 32], strides = [1, 1]} : vector<16x384xf32> to vector<16x32xf32>
    %31 = vector.extract_strided_slice %6 {offsets = [0, 288], sizes = [16, 32], strides = [1, 1]} : vector<16x384xf32> to vector<16x32xf32>
    %cst_16 = arith.constant dense<0.000000e+00> : vector<16x16xf32>
    %32 = tpu.matmul %29, %30, %cst_16 {dimension_numbers = #tpu.dot_dimension_numbers<[1], [1], [0], [0], [0, 0, 1, 0], [], []>} : vector<16x32xf32>, vector<16x32xf32>, vector<16x16xf32> -> vector<16x16xf32>
    %cst_17 = arith.constant 0.176776692 : f32
    %33 = vector.broadcast %cst_17 : f32 to vector<16x16xf32>
    %34 = arith.mulf %32, %33 : vector<16x16xf32>
    %35 = vector.broadcast %8 : vector<1x16xf32> to vector<16x16xf32>
    %36 = arith.addf %34, %35 : vector<16x16xf32>
    %cst_18 = arith.constant dense<0xFF800000> : vector<16xf32>
    %37 = vector.multi_reduction <maximumf>, %36, %cst_18 [1] : vector<16x16xf32> to vector<16xf32>
    %38 = vector.shape_cast %37 : vector<16xf32> to vector<16x1xf32>
    %39 = vector.broadcast %38 : vector<16x1xf32> to vector<16x16xf32>
    %40 = arith.subf %36, %39 : vector<16x16xf32>
    %41 = math.exp %40 : vector<16x16xf32>
    %cst_19 = arith.constant dense<0.000000e+00> : vector<16xf32>
    %42 = vector.multi_reduction <add>, %41, %cst_19 [1] : vector<16x16xf32> to vector<16xf32>
    %43 = vector.shape_cast %42 : vector<16xf32> to vector<16x1xf32>
    %44 = tpu.reciprocal %43 {approx = true} : vector<16x1xf32> -> vector<16x1xf32>
    %45 = vector.broadcast %44 : vector<16x1xf32> to vector<16x16xf32>
    %46 = arith.mulf %41, %45 : vector<16x16xf32>
    %cst_20 = arith.constant dense<0.000000e+00> : vector<16x32xf32>
    %47 = tpu.matmul %46, %31, %cst_20 {dimension_numbers = #tpu.dot_dimension_numbers<[1], [0], [0], [1], [0, 0, 1, 1], [], []>} : vector<16x16xf32>, vector<16x32xf32>, vector<16x32xf32> -> vector<16x32xf32>
    %c0_21 = arith.constant 0 : index
    %c32 = arith.constant 32 : index
    %48 = vector.load %arg10[%c0_21, %c32] : memref<16x128xf32, #tpu.memory_space<vmem>>, vector<16x32xf32>
    tpu.vector_store %arg10[%c0_21, %c32], %47 {strides = array<i32>} : memref<16x128xf32, #tpu.memory_space<vmem>>, vector<16x32xf32>,
    %49 = vector.extract_strided_slice %6 {offsets = [0, 64], sizes = [16, 32], strides = [1, 1]} : vector<16x384xf32> to vector<16x32xf32>
    %50 = vector.extract_strided_slice %6 {offsets = [0, 192], sizes = [16, 32], strides = [1, 1]} : vector<16x384xf32> to vector<16x32xf32>
    %51 = vector.extract_strided_slice %6 {offsets = [0, 320], sizes = [16, 32], strides = [1, 1]} : vector<16x384xf32> to vector<16x32xf32>
    %cst_22 = arith.constant dense<0.000000e+00> : vector<16x16xf32>
    %52 = tpu.matmul %49, %50, %cst_22 {dimension_numbers = #tpu.dot_dimension_numbers<[1], [1], [0], [0], [0, 0, 1, 0], [], []>} : vector<16x32xf32>, vector<16x32xf32>, vector<16x16xf32> -> vector<16x16xf32>
    %cst_23 = arith.constant 0.176776692 : f32
    %53 = vector.broadcast %cst_23 : f32 to vector<16x16xf32>
    %54 = arith.mulf %52, %53 : vector<16x16xf32>
    %55 = vector.broadcast %8 : vector<1x16xf32> to vector<16x16xf32>
    %56 = arith.addf %54, %55 : vector<16x16xf32>
    %cst_24 = arith.constant dense<0xFF800000> : vector<16xf32>
    %57 = vector.multi_reduction <maximumf>, %56, %cst_24 [1] : vector<16x16xf32> to vector<16xf32>
    %58 = vector.shape_cast %57 : vector<16xf32> to vector<16x1xf32>
    %59 = vector.broadcast %58 : vector<16x1xf32> to vector<16x16xf32>
    %60 = arith.subf %56, %59 : vector<16x16xf32>
    %61 = math.exp %60 : vector<16x16xf32>
    %cst_25 = arith.constant dense<0.000000e+00> : vector<16xf32>
    %62 = vector.multi_reduction <add>, %61, %cst_25 [1] : vector<16x16xf32> to vector<16xf32>
    %63 = vector.shape_cast %62 : vector<16xf32> to vector<16x1xf32>
    %64 = tpu.reciprocal %63 {approx = true} : vector<16x1xf32> -> vector<16x1xf32>
    %65 = vector.broadcast %64 : vector<16x1xf32> to vector<16x16xf32>
    %66 = arith.mulf %61, %65 : vector<16x16xf32>
    %cst_26 = arith.constant dense<0.000000e+00> : vector<16x32xf32>
    %67 = tpu.matmul %66, %51, %cst_26 {dimension_numbers = #tpu.dot_dimension_numbers<[1], [0], [0], [1], [0, 0, 1, 1], [], []>} : vector<16x16xf32>, vector<16x32xf32>, vector<16x32xf32> -> vector<16x32xf32>
    %c0_27 = arith.constant 0 : index
    %c64 = arith.constant 64 : index
    %68 = vector.load %arg10[%c0_27, %c64] : memref<16x128xf32, #tpu.memory_space<vmem>>, vector<16x32xf32>
    tpu.vector_store %arg10[%c0_27, %c64], %67 {strides = array<i32>} : memref<16x128xf32, #tpu.memory_space<vmem>>, vector<16x32xf32>,
    %69 = vector.extract_strided_slice %6 {offsets = [0, 96], sizes = [16, 32], strides = [1, 1]} : vector<16x384xf32> to vector<16x32xf32>
    %70 = vector.extract_strided_slice %6 {offsets = [0, 224], sizes = [16, 32], strides = [1, 1]} : vector<16x384xf32> to vector<16x32xf32>
    %71 = vector.extract_strided_slice %6 {offsets = [0, 352], sizes = [16, 32], strides = [1, 1]} : vector<16x384xf32> to vector<16x32xf32>
    %cst_28 = arith.constant dense<0.000000e+00> : vector<16x16xf32>
    %72 = tpu.matmul %69, %70, %cst_28 {dimension_numbers = #tpu.dot_dimension_numbers<[1], [1], [0], [0], [0, 0, 1, 0], [], []>} : vector<16x32xf32>, vector<16x32xf32>, vector<16x16xf32> -> vector<16x16xf32>
    %cst_29 = arith.constant 0.176776692 : f32
    %73 = vector.broadcast %cst_29 : f32 to vector<16x16xf32>
    %74 = arith.mulf %72, %73 : vector<16x16xf32>
    %75 = vector.broadcast %8 : vector<1x16xf32> to vector<16x16xf32>
    %76 = arith.addf %74, %75 : vector<16x16xf32>
    %cst_30 = arith.constant dense<0xFF800000> : vector<16xf32>
    %77 = vector.multi_reduction <maximumf>, %76, %cst_30 [1] : vector<16x16xf32> to vector<16xf32>
    %78 = vector.shape_cast %77 : vector<16xf32> to vector<16x1xf32>
    %79 = vector.broadcast %78 : vector<16x1xf32> to vector<16x16xf32>
    %80 = arith.subf %76, %79 : vector<16x16xf32>
    %81 = math.exp %80 : vector<16x16xf32>
    %cst_31 = arith.constant dense<0.000000e+00> : vector<16xf32>
    %82 = vector.multi_reduction <add>, %81, %cst_31 [1] : vector<16x16xf32> to vector<16xf32>
    %83 = vector.shape_cast %82 : vector<16xf32> to vector<16x1xf32>
    %84 = tpu.reciprocal %83 {approx = true} : vector<16x1xf32> -> vector<16x1xf32>
    %85 = vector.broadcast %84 : vector<16x1xf32> to vector<16x16xf32>
    %86 = arith.mulf %81, %85 : vector<16x16xf32>
    %cst_32 = arith.constant dense<0.000000e+00> : vector<16x32xf32>
    %87 = tpu.matmul %86, %71, %cst_32 {dimension_numbers = #tpu.dot_dimension_numbers<[1], [0], [0], [1], [0, 0, 1, 1], [], []>} : vector<16x16xf32>, vector<16x32xf32>, vector<16x32xf32> -> vector<16x32xf32>
    %c0_33 = arith.constant 0 : index
    %c96 = arith.constant 96 : index
    %88 = vector.load %arg10[%c0_33, %c96] : memref<16x128xf32, #tpu.memory_space<vmem>>, vector<16x32xf32>
    tpu.vector_store %arg10[%c0_33, %c96], %87 {strides = array<i32>} : memref<16x128xf32, #tpu.memory_space<vmem>>, vector<16x32xf32>,
    %c0_34 = arith.constant 0 : index
    %c0_35 = arith.constant 0 : index
    %89 = vector.load %arg10[%c0_34, %c0_35] : memref<16x128xf32, #tpu.memory_space<vmem>>, vector<16x128xf32>
    %c0_36 = arith.constant 0 : index
    %c0_37 = arith.constant 0 : index
    %90 = vector.load %arg5[%c0_36, %c0_37] : memref<128x128xf32, #tpu.memory_space<vmem>>, vector<128x128xf32>
    %cst_38 = arith.constant dense<0.000000e+00> : vector<16x128xf32>
    %91 = tpu.matmul %89, %90, %cst_38 {dimension_numbers = #tpu.dot_dimension_numbers<[1], [0], [0], [1], [0, 0, 1, 1], [], []>} : vector<16x128xf32>, vector<128x128xf32>, vector<16x128xf32> -> vector<16x128xf32>
    %c0_39 = arith.constant 0 : index
    %c0_40 = arith.constant 0 : index
    %92 = vector.load %arg6[%c0_39, %c0_40] : memref<1x128xf32, #tpu.memory_space<vmem>>, vector<1x128xf32>
    %93 = vector.broadcast %92 : vector<1x128xf32> to vector<16x128xf32>
    %94 = arith.addf %91, %93 : vector<16x128xf32>
    %95 = arith.addf %1, %94 : vector<16x128xf32>
    %cst_41 = arith.constant dense<0.000000e+00> : vector<16xf32>
    %96 = vector.multi_reduction <add>, %95, %cst_41 [1] : vector<16x128xf32> to vector<16xf32>
    %97 = vector.shape_cast %96 : vector<16xf32> to vector<16x1xf32>
    %cst_42 = arith.constant 1.280000e+02 : f32
    %98 = vector.broadcast %cst_42 : f32 to vector<16x1xf32>
    %99 = arith.divf %97, %98 : vector<16x1xf32>
    %100 = vector.broadcast %99 : vector<16x1xf32> to vector<16x128xf32>
    %101 = arith.subf %95, %100 : vector<16x128xf32>
    %102 = arith.mulf %101, %101 : vector<16x128xf32>
    %cst_43 = arith.constant dense<0.000000e+00> : vector<16xf32>
    %103 = vector.multi_reduction <add>, %102, %cst_43 [1] : vector<16x128xf32> to vector<16xf32>
    %104 = vector.shape_cast %103 : vector<16xf32> to vector<16x1xf32>
    %cst_44 = arith.constant 1.280000e+02 : f32
    %105 = vector.broadcast %cst_44 : f32 to vector<16x1xf32>
    %106 = arith.divf %104, %105 : vector<16x1xf32>
    %cst_45 = arith.constant 9.99999974E-6 : f32
    %107 = vector.broadcast %cst_45 : f32 to vector<16x1xf32>
    %108 = arith.addf %106, %107 : vector<16x1xf32>
    %109 = math.rsqrt %108 : vector<16x1xf32>
    %110 = vector.broadcast %109 : vector<16x1xf32> to vector<16x128xf32>
    %111 = arith.mulf %101, %110 : vector<16x128xf32>
    %c0_46 = arith.constant 0 : index
    %c0_47 = arith.constant 0 : index
    %112 = vector.load %arg7[%c0_46, %c0_47] : memref<1x128xf32, #tpu.memory_space<vmem>>, vector<1x128xf32>
    %113 = vector.broadcast %112 : vector<1x128xf32> to vector<16x128xf32>
    %114 = arith.mulf %111, %113 : vector<16x128xf32>
    %c0_48 = arith.constant 0 : index
    %c0_49 = arith.constant 0 : index
    %115 = vector.load %arg8[%c0_48, %c0_49] : memref<1x128xf32, #tpu.memory_space<vmem>>, vector<1x128xf32>
    %116 = vector.broadcast %115 : vector<1x128xf32> to vector<16x128xf32>
    %117 = arith.addf %114, %116 : vector<16x128xf32>
    %c0_50 = arith.constant 0 : index
    %c0_51 = arith.constant 0 : index
    %c0_52 = arith.constant 0 : index
    %118 = vector.load %arg9[%c0_50, %c0_51, %c0_52] : memref<1x16x128xf32, #tpu.memory_space<vmem>>, vector<1x16x128xf32>
    %119 = vector.shape_cast %118 : vector<1x16x128xf32> to vector<16x128xf32>
    %120 = vector.shape_cast %117 : vector<16x128xf32> to vector<1x16x128xf32>
    tpu.vector_store %arg9[%c0_50, %c0_51, %c0_52], %120 {strides = array<i32>} : memref<1x16x128xf32, #tpu.memory_space<vmem>>, vector<1x16x128xf32>,
    return
  }
  func.func @transform_0(%arg0: i32) -> (i32, i32, i32) {
    %c0_i32 = arith.constant 0 : i32
    %c0_i32_0 = arith.constant 0 : i32
    %c0_i32_1 = arith.constant 0 : i32
    return %arg0, %c0_i32, %c0_i32_0 : i32, i32, i32
  }
  func.func @transform_1(%arg0: i32) -> (i32, i32, i32) {
    %c0_i32 = arith.constant 0 : i32
    %c0_i32_0 = arith.constant 0 : i32
    %c0_i32_1 = arith.constant 0 : i32
    return %arg0, %c0_i32, %c0_i32_0 : i32, i32, i32
  }
  func.func @transform_2(%arg0: i32) -> (i32, i32) {
    %c0_i32 = arith.constant 0 : i32
    %c0_i32_0 = arith.constant 0 : i32
    %c0_i32_1 = arith.constant 0 : i32
    return %c0_i32, %c0_i32_0 : i32, i32
  }
  func.func @transform_3(%arg0: i32) -> (i32, i32) {
    %c0_i32 = arith.constant 0 : i32
    %c0_i32_0 = arith.constant 0 : i32
    %c0_i32_1 = arith.constant 0 : i32
    return %c0_i32, %c0_i32_0 : i32, i32
  }
  func.func @transform_4(%arg0: i32) -> (i32, i32) {
    %c0_i32 = arith.constant 0 : i32
    %c0_i32_0 = arith.constant 0 : i32
    %c0_i32_1 = arith.constant 0 : i32
    return %c0_i32, %c0_i32_0 : i32, i32
  }
  func.func @transform_5(%arg0: i32) -> (i32, i32) {
    %c0_i32 = arith.constant 0 : i32
    %c0_i32_0 = arith.constant 0 : i32
    %c0_i32_1 = arith.constant 0 : i32
    return %c0_i32, %c0_i32_0 : i32, i32
  }
  func.func @transform_6(%arg0: i32) -> (i32, i32) {
    %c0_i32 = arith.constant 0 : i32
    %c0_i32_0 = arith.constant 0 : i32
    %c0_i32_1 = arith.constant 0 : i32
    return %c0_i32, %c0_i32_0 : i32, i32
  }
  func.func @transform_7(%arg0: i32) -> (i32, i32) {
    %c0_i32 = arith.constant 0 : i32
    %c0_i32_0 = arith.constant 0 : i32
    %c0_i32_1 = arith.constant 0 : i32
    return %c0_i32, %c0_i32_0 : i32, i32
  }
  func.func @transform_8(%arg0: i32) -> (i32, i32, i32) {
    %c0_i32 = arith.constant 0 : i32
    %c0_i32_0 = arith.constant 0 : i32
    %c0_i32_1 = arith.constant 0 : i32
    return %arg0, %c0_i32, %c0_i32_0 : i32, i32, i32
  }
}

</mosaic_0001>

<llo_original>
// kernel: tpu_custom_call.1
$region0: #{tpu_custom_call.1}
  #allocation0 [shape = 'u32[]', space=smem, size = 0x4, offset = 0x4, fixed_abs, tag = 'smem constant byte address 0x4 - core index']
  #allocation1 [shape = 'u32[144,128]{1,0:T(1,128)}', space=vmem, size = 0x12000, scoped, tag = 'internal scratch']
  #allocation2 [shape = 'f32[16,128]{1,0:T(8,128)}', space=vmem, size = 0x2000, scoped, tag = 'scratch operand']
  %s0 = inlined_call_operand.hbm [shape: f32[2,16,128], index: 0, kind: input, shape index: {}]
  %s1 = inlined_call_operand.vmem [shape: f32[2,1,16], index: 1, kind: input, shape index: {}]
  %s2 = inlined_call_operand.hbm [shape: f32[128,384], index: 2, kind: input, shape index: {}]
  %s3 = inlined_call_operand.vmem [shape: f32[1,384], index: 3, kind: input, shape index: {}]
  %s4 = inlined_call_operand.hbm [shape: f32[128,128], index: 4, kind: input, shape index: {}]
  %s5 = inlined_call_operand.vmem [shape: f32[1,128], index: 5, kind: input, shape index: {}]
  %s6 = inlined_call_operand.vmem [shape: f32[1,128], index: 6, kind: input, shape index: {}]
  %s7 = inlined_call_operand.vmem [shape: f32[1,128], index: 7, kind: input, shape index: {}]
  %s8 = inlined_call_operand.hbm [shape: f32[2,16,128], index: 8, kind: output, shape index: {}]
  %s9 = sld [smem:[#allocation0]]
  $region77: #{tpu_custom_call.1} parent=0
    _
  %s11 = ssub.s32 1, %s9
  %s12 = scalar_select 0, %s11, %s9
  $region1: #{tpu_custom_call.1} parent=0
    #allocation3 [shape = 'u8[16384]{0}', space=vmem, size = 0x4000, scoped, tag = 'input window, operand 0']
    #allocation4 [shape = 's32[2]{0}', space=sflag, size = 0x8, scoped, tag = 'scoped memory for tpu_custom_call.1']
    #allocation5 [shape = 's32[2]{0}', space=sflag, size = 0x8, scoped, tag = 'scoped memory for tpu_custom_call.1']
    #allocation6 [shape = 'u8[196608]{0}', space=vmem, size = 0x30000, scoped, tag = 'input window, operand 2, single buffered']
    #allocation7 [shape = 's32[1]{0}', space=sflag, size = 0x4, scoped, tag = 'scoped memory for tpu_custom_call.1']
    #allocation8 [shape = 'u8[65536]{0}', space=vmem, size = 0x10000, scoped, tag = 'input window, operand 4, single buffered']
    #allocation9 [shape = 'u8[16384]{0}', space=vmem, size = 0x4000, scoped, tag = 'output window, operand 0']
    %13 = vsyncpa [#allocation4], 0
    %s14 = scalar_lea.sflag [#allocation4], 1
    %15 = vsyncpa %s14, 0
    %16 = vsyncpa [#allocation7], 0
    %17 = vsyncpa [#allocation5], 0
    %s18 = scalar_lea.sflag [#allocation5], 1
    %19 = vsyncpa %s18, 0
    loop: start=0, step=1, limit=4
    $region2: #{tpu_custom_call.1} parent=1 // loop_pre_header
      _
    $region3: #{tpu_custom_call.1} parent=1 // loop_header
      %s21 = sphi 0, %s25
      %p22 = scmp.ge.s32.totalorder %s21, 4
      %s31 = sphi 0, %s33
      %s34 = sphi 0, %s31
      %s35 = sphi 0, %s34
      %s51 = sphi 0, %s35
      %s57 = sphi 0, %s59
      %s60 = sphi 0, %s57
      %s61 = sphi 0, %s60
      %s77 = sphi 0, %s61
      %s81 = sphi 0, %s81
      %s83 = sphi 0, %s81
      %s84 = sphi 0, %s83
      %s98 = sphi 0, %s84
      %s102 = sphi 0, %s102
      %s104 = sphi 0, %s102
      %s105 = sphi 0, %s104
      %s119 = sphi 0, %s105
      %s123 = sphi 0, %s123
      %s125 = sphi 0, %s123
      %s126 = sphi 0, %s125
      %s140 = sphi 0, %s126
      %s144 = sphi 0, %s144
      %s146 = sphi 0, %s144
      %s147 = sphi 0, %s146
      %s161 = sphi 0, %s147
      %s165 = sphi 0, %s165
      %s167 = sphi 0, %s165
      %s168 = sphi 0, %s167
      %s182 = sphi 0, %s168
      %s186 = sphi 0, %s186
      %s188 = sphi 0, %s186
      %s189 = sphi 0, %s188
      %s203 = sphi 0, %s189
      %s209 = sphi 0, %s211
      %s212 = sphi 0, %s209
      %s213 = sphi 0, %s212
      %s229 = sphi 0, %s213
    $region4: #{tpu_custom_call.1} parent=1 // loop_header_branch
      %24 = sbr.rel (%p22) target = $region8
    $region5: #{tpu_custom_call.1} parent=1 // loop_body
      %s26 = ssub.s32 %s21, 1
      %s27 = ssub.s32 %s21, 2
      %s28 = sadd.s32 %s21, 1
      %s29 = ssub.s32 %s21, %s28
      %p30 = scmp.eq.s32.totalorder %s29, 0
      %s32 = sadd.s32 %s31, 1
      %s33 = scalar_select %p30, %s31, %s32
      %p36 = pneg %p30
      %p37 = scmp.eq.s32.totalorder %s21, 1
      %p38 = por %p36, %p37
      %p39 = scmp.ne.s32.totalorder %s31, %s34
      %p40 = scmp.eq.s32.totalorder %s21, 0
      %p41 = por %p39, %p40
      %p42 = scmp.ne.s32.totalorder %s31, %s34
      %p43 = scmp.eq.s32.totalorder %s26, 1
      %p44 = por %p42, %p43
      %p45 = scmp.ne.s32.totalorder %s34, %s35
      %p46 = scmp.eq.s32.totalorder %s26, 0
      %p47 = por %p45, %p46
      %p48 = scmp.ne.s32.totalorder %s34, %s35
      %p49 = scmp.eq.s32.totalorder %s27, 1
      %p50 = por %p48, %p49
      %p52 = scmp.ne.s32.totalorder %s35, %s51
      %p53 = scmp.eq.s32.totalorder %s27, 0
      %p54 = por %p52, %p53
      %s55 = ssub.s32 %s21, %s28
      %p56 = scmp.eq.s32.totalorder %s55, 0
      %s58 = sadd.s32 %s57, 1
      %s59 = scalar_select %p56, %s57, %s58
      %p62 = pneg %p56
      %p63 = scmp.eq.s32.totalorder %s21, 1
      %p64 = por %p62, %p63
      %p65 = scmp.ne.s32.totalorder %s57, %s60
      %p66 = scmp.eq.s32.totalorder %s21, 0
      %p67 = por %p65, %p66
      %p68 = scmp.ne.s32.totalorder %s57, %s60
      %p69 = scmp.eq.s32.totalorder %s26, 1
      %p70 = por %p68, %p69
      %p71 = scmp.ne.s32.totalorder %s60, %s61
      %p72 = scmp.eq.s32.totalorder %s26, 0
      %p73 = por %p71, %p72
      %p74 = scmp.ne.s32.totalorder %s60, %s61
      %p75 = scmp.eq.s32.totalorder %s27, 1
      %p76 = por %p74, %p75
      %p78 = scmp.ne.s32.totalorder %s61, %s77
      %p79 = scmp.eq.s32.totalorder %s27, 0
      %p80 = por %p78, %p79
      %s82 = sadd.s32 %s81, 1
      %p85 = scmp.eq.s32.totalorder %s21, 1
      %p86 = scmp.ne.s32.totalorder %s81, %s83
      %p87 = scmp.eq.s32.totalorder %s21, 0
      %p88 = por %p86, %p87
      %p89 = scmp.ne.s32.totalorder %s81, %s83
      %p90 = scmp.eq.s32.totalorder %s26, 1
      %p91 = por %p89, %p90
      %p92 = scmp.ne.s32.totalorder %s83, %s84
      %p93 = scmp.eq.s32.totalorder %s26, 0
      %p94 = por %p92, %p93
      %p95 = scmp.ne.s32.totalorder %s83, %s84
      %p96 = scmp.eq.s32.totalorder %s27, 1
      %p97 = por %p95, %p96
      %p99 = scmp.ne.s32.totalorder %s84, %s98
      %p100 = scmp.eq.s32.totalorder %s27, 0
      %p101 = por %p99, %p100
      %s103 = sadd.s32 %s102, 1
      %p106 = scmp.eq.s32.totalorder %s21, 1
      %p107 = scmp.ne.s32.totalorder %s102, %s104
      %p108 = scmp.eq.s32.totalorder %s21, 0
      %p109 = por %p107, %p108
      %p110 = scmp.ne.s32.totalorder %s102, %s104
      %p111 = scmp.eq.s32.totalorder %s26, 1
      %p112 = por %p110, %p111
      %p113 = scmp.ne.s32.totalorder %s104, %s105
      %p114 = scmp.eq.s32.totalorder %s26, 0
      %p115 = por %p113, %p114
      %p116 = scmp.ne.s32.totalorder %s104, %s105
      %p117 = scmp.eq.s32.totalorder %s27, 1
      %p118 = por %p116, %p117
      %p120 = scmp.ne.s32.totalorder %s105, %s119
      %p121 = scmp.eq.s32.totalorder %s27, 0
      %p122 = por %p120, %p121
      %s124 = sadd.s32 %s123, 1
      %p127 = scmp.eq.s32.totalorder %s21, 1
      %p128 = scmp.ne.s32.totalorder %s123, %s125
      %p129 = scmp.eq.s32.totalorder %s21, 0
      %p130 = por %p128, %p129
      %p131 = scmp.ne.s32.totalorder %s123, %s125
      %p132 = scmp.eq.s32.totalorder %s26, 1
      %p133 = por %p131, %p132
      %p134 = scmp.ne.s32.totalorder %s125, %s126
      %p135 = scmp.eq.s32.totalorder %s26, 0
      %p136 = por %p134, %p135
      %p137 = scmp.ne.s32.totalorder %s125, %s126
      %p138 = scmp.eq.s32.totalorder %s27, 1
      %p139 = por %p137, %p138
      %p141 = scmp.ne.s32.totalorder %s126, %s140
      %p142 = scmp.eq.s32.totalorder %s27, 0
      %p143 = por %p141, %p142
      %s145 = sadd.s32 %s144, 1
      %p148 = scmp.eq.s32.totalorder %s21, 1
      %p149 = scmp.ne.s32.totalorder %s144, %s146
      %p150 = scmp.eq.s32.totalorder %s21, 0
      %p151 = por %p149, %p150
      %p152 = scmp.ne.s32.totalorder %s144, %s146
      %p153 = scmp.eq.s32.totalorder %s26, 1
      %p154 = por %p152, %p153
      %p155 = scmp.ne.s32.totalorder %s146, %s147
      %p156 = scmp.eq.s32.totalorder %s26, 0
      %p157 = por %p155, %p156
      %p158 = scmp.ne.s32.totalorder %s146, %s147
      %p159 = scmp.eq.s32.totalorder %s27, 1
      %p160 = por %p158, %p159
      %p162 = scmp.ne.s32.totalorder %s147, %s161
      %p163 = scmp.eq.s32.totalorder %s27, 0
      %p164 = por %p162, %p163
      %s166 = sadd.s32 %s165, 1
      %p169 = scmp.eq.s32.totalorder %s21, 1
      %p170 = scmp.ne.s32.totalorder %s165, %s167
      %p171 = scmp.eq.s32.totalorder %s21, 0
      %p172 = por %p170, %p171
      %p173 = scmp.ne.s32.totalorder %s165, %s167
      %p174 = scmp.eq.s32.totalorder %s26, 1
      %p175 = por %p173, %p174
      %p176 = scmp.ne.s32.totalorder %s167, %s168
      %p177 = scmp.eq.s32.totalorder %s26, 0
      %p178 = por %p176, %p177
      %p179 = scmp.ne.s32.totalorder %s167, %s168
      %p180 = scmp.eq.s32.totalorder %s27, 1
      %p181 = por %p179, %p180
      %p183 = scmp.ne.s32.totalorder %s168, %s182
      %p184 = scmp.eq.s32.totalorder %s27, 0
      %p185 = por %p183, %p184
      %s187 = sadd.s32 %s186, 1
      %p190 = scmp.eq.s32.totalorder %s21, 1
      %p191 = scmp.ne.s32.totalorder %s186, %s188
      %p192 = scmp.eq.s32.totalorder %s21, 0
      %p193 = por %p191, %p192
      %p194 = scmp.ne.s32.totalorder %s186, %s188
      %p195 = scmp.eq.s32.totalorder %s26, 1
      %p196 = por %p194, %p195
      %p197 = scmp.ne.s32.totalorder %s188, %s189
      %p198 = scmp.eq.s32.totalorder %s26, 0
      %p199 = por %p197, %p198
      %p200 = scmp.ne.s32.totalorder %s188, %s189
      %p201 = scmp.eq.s32.totalorder %s27, 1
      %p202 = por %p200, %p201
      %p204 = scmp.ne.s32.totalorder %s189, %s203
      %p205 = scmp.eq.s32.totalorder %s27, 0
      %p206 = por %p204, %p205
      %s207 = ssub.s32 %s21, %s28
      %p208 = scmp.eq.s32.totalorder %s207, 0
      %s210 = sadd.s32 %s209, 1
      %s211 = scalar_select %p208, %s209, %s210
      %p214 = pneg %p208
      %p215 = scmp.eq.s32.totalorder %s21, 1
      %p216 = por %p214, %p215
      %p217 = scmp.ne.s32.totalorder %s209, %s212
      %p218 = scmp.eq.s32.totalorder %s21, 0
      %p219 = por %p217, %p218
      %p220 = scmp.ne.s32.totalorder %s209, %s212
      %p221 = scmp.eq.s32.totalorder %s26, 1
      %p222 = por %p220, %p221
      %p223 = scmp.ne.s32.totalorder %s212, %s213
      %p224 = scmp.eq.s32.totalorder %s26, 0
      %p225 = por %p223, %p224
      %p226 = scmp.ne.s32.totalorder %s212, %s213
      %p227 = scmp.eq.s32.totalorder %s27, 1
      %p228 = por %p226, %p227
      %p230 = scmp.ne.s32.totalorder %s213, %s229
      %p231 = scmp.eq.s32.totalorder %s27, 0
      %p232 = por %p230, %p231
      %p233 = scmp.le.s32.totalorder 1, %s21
      %p234 = scmp.lt.s32.totalorder %s21, 3
      %p235 = pnand %p233, %p234
      %p236 = pneg %p235
      // Predicated region
      $region9: #{tpu_custom_call.1} parent=5 // pred_check
        _
      $region10: #{tpu_custom_call.1} parent=5 // pred_check_branch
        %238 = sbr.rel (%p235) target = $region12
      $region11: #{tpu_custom_call.1} parent=5 // pred_region
        %s239 = ssub.s32 %s21, 1
        // Predicated region
        $region13: #{tpu_custom_call.1} parent=11 // pred_check
          %p240 = pneg %p94
        $region14: #{tpu_custom_call.1} parent=11 // pred_check_branch
          %242 = sbr.rel (%p240) target = $region16
        $region15: #{tpu_custom_call.1} parent=11 // pred_region
          %s244 = ssub.s32 6144, 6144
          %245 = vsyncadd [#allocation7], %s244
          %s246 = sshll.u32 [#allocation6], 4
          %s247 = int_to_ptr.vmem [resolvable:$true] %s246
          %252 = dma.hbm_to_vmem [thread:$0]  %s2, 6144, %s247, [#allocation7], 384, 384, 24
        $region16: #{tpu_custom_call.1} parent=11 // pred_fallthru
          _
        // Predicated region
        $region17: #{tpu_custom_call.1} parent=11 // pred_check
          %p253 = pneg %p115
        $region18: #{tpu_custom_call.1} parent=11 // pred_check_branch
          %255 = sbr.rel (%p253) target = $region20
        $region19: #{tpu_custom_call.1} parent=11 // pred_region
          _
        $region20: #{tpu_custom_call.1} parent=11 // pred_fallthru
          _
        // Predicated region
        $region21: #{tpu_custom_call.1} parent=11 // pred_check
          %p256 = pneg %p136
        $region22: #{tpu_custom_call.1} parent=11 // pred_check_branch
          %258 = sbr.rel (%p256) target = $region24
        $region23: #{tpu_custom_call.1} parent=11 // pred_region
          %s260 = ssub.s32 2048, 2048
          %261 = vsyncadd [#allocation7], %s260
          %s262 = sshll.u32 [#allocation8], 4
          %s263 = int_to_ptr.vmem [resolvable:$true] %s262
          %268 = dma.hbm_to_vmem [thread:$0]  %s4, 2048, %s263, [#allocation7], 128, 128, 8
        $region24: #{tpu_custom_call.1} parent=11 // pred_fallthru
          _
        // Predicated region
        $region25: #{tpu_custom_call.1} parent=11 // pred_check
          %p269 = pneg %p157
        $region26: #{tpu_custom_call.1} parent=11 // pred_check_branch
          %271 = sbr.rel (%p269) target = $region28
        $region27: #{tpu_custom_call.1} parent=11 // pred_region
          _
        $region28: #{tpu_custom_call.1} parent=11 // pred_fallthru
          _
        // Predicated region
        $region29: #{tpu_custom_call.1} parent=11 // pred_check
          %p272 = pneg %p178
        $region30: #{tpu_custom_call.1} parent=11 // pred_check_branch
          %274 = sbr.rel (%p272) target = $region32
        $region31: #{tpu_custom_call.1} parent=11 // pred_region
          _
        $region32: #{tpu_custom_call.1} parent=11 // pred_fallthru
          _
        // Predicated region
        $region33: #{tpu_custom_call.1} parent=11 // pred_check
          %p275 = pneg %p199
        $region34: #{tpu_custom_call.1} parent=11 // pred_check_branch
          %277 = sbr.rel (%p275) target = $region36
        $region35: #{tpu_custom_call.1} parent=11 // pred_region
          _
        $region36: #{tpu_custom_call.1} parent=11 // pred_fallthru
          _
      $region12: #{tpu_custom_call.1} parent=5 // pred_fallthru
        _
      %p278 = scmp.lt.s32.totalorder %s21, 2
      // Predicated region
      $region37: #{tpu_custom_call.1} parent=5 // pred_check
        %p279 = pneg %p278
      $region38: #{tpu_custom_call.1} parent=5 // pred_check_branch
        %281 = sbr.rel (%p279) target = $region40
      $region39: #{tpu_custom_call.1} parent=5 // pred_region
        // Predicated region
        $region41: #{tpu_custom_call.1} parent=39 // pred_check
          %p282 = pneg %p41
        $region42: #{tpu_custom_call.1} parent=39 // pred_check_branch
          %284 = sbr.rel (%p282) target = $region44
        $region43: #{tpu_custom_call.1} parent=39 // pred_region
          %s285 = sand.u32 %s31, 1
          %s286 = scalar_lea.sflag [#allocation4], %s285
          %s287 = sand.u32 %s31, 1
          %s288 = smul.addr %s287, 16
          %s289 = scalar_lea.vmem [#allocation3], %s288
          %s291 = ssub.s32 256, 256
          %292 = vsyncadd %s286, %s291
          %s293 = smul.addr %s21, 2
          %s294 = smul.addr %s293, 128
          %s295 = scalar_lea.hbm %s0, %s294
          %s296 = sshll.u32 %s289, 4
          %s297 = int_to_ptr.vmem [resolvable:$true] %s296
          %302 = dma.hbm_to_vmem [thread:$0]  %s295, 256, %s297, %s286, 128, 128, 8
        $region44: #{tpu_custom_call.1} parent=39 // pred_fallthru
          _
        // Predicated region
        $region45: #{tpu_custom_call.1} parent=39 // pred_check
          %p303 = pneg %p67
        $region46: #{tpu_custom_call.1} parent=39 // pred_check_branch
          %305 = sbr.rel (%p303) target = $region48
        $region47: #{tpu_custom_call.1} parent=39 // pred_region
          %p306 = scmp.lt.s32.totalorder %s21, 1
          %s307 = scalar_select %p306, %s21, 1
          %s308 = scalar_lea.vmem %s1, %s307
        $region48: #{tpu_custom_call.1} parent=39 // pred_fallthru
          _
      $region40: #{tpu_custom_call.1} parent=5 // pred_fallthru
        _
      %p309 = scmp.le.s32.totalorder 1, %s21
      %p310 = scmp.lt.s32.totalorder %s21, 3
      %p311 = pnand %p309, %p310
      %p312 = pneg %p311
      // Predicated region
      $region49: #{tpu_custom_call.1} parent=5 // pred_check
        _
      $region50: #{tpu_custom_call.1} parent=5 // pred_check_branch
        %314 = sbr.rel (%p311) target = $region52
      $region51: #{tpu_custom_call.1} parent=5 // pred_region
        %s315 = ssub.s32 %s21, 1
        %s316 = sand.u32 %s34, 1
        %s317 = scalar_lea.sflag [#allocation4], %s316
        %s318 = sand.u32 %s34, 1
        %s319 = smul.addr %s318, 16
        %s320 = scalar_lea.vmem [#allocation3], %s319
        // Predicated region
        $region53: #{tpu_custom_call.1} parent=51 // pred_check
          %p321 = pneg %p47
        $region54: #{tpu_custom_call.1} parent=51 // pred_check_branch
          %323 = sbr.rel (%p321) target = $region56
        $region55: #{tpu_custom_call.1} parent=51 // pred_region
          %324 = dma.done %s317, 256
        $region56: #{tpu_custom_call.1} parent=51 // pred_fallthru
          _
        // Predicated region
        $region57: #{tpu_custom_call.1} parent=51 // pred_check
          %p325 = pneg %p94
        $region58: #{tpu_custom_call.1} parent=51 // pred_check_branch
          %327 = sbr.rel (%p325) target = $region60
        $region59: #{tpu_custom_call.1} parent=51 // pred_region
          %328 = dma.done [#allocation7], 6144
        $region60: #{tpu_custom_call.1} parent=51 // pred_fallthru
          _
        // Predicated region
        $region61: #{tpu_custom_call.1} parent=51 // pred_check
          %p329 = pneg %p136
        $region62: #{tpu_custom_call.1} parent=51 // pred_check_branch
          %331 = sbr.rel (%p329) target = $region64
        $region63: #{tpu_custom_call.1} parent=51 // pred_region
          %332 = dma.done [#allocation7], 2048
        $region64: #{tpu_custom_call.1} parent=51 // pred_fallthru
          _
        %s333 = sand.u32 %s34, 1
        %s334 = scalar_lea.sflag [#allocation4], %s333
        %s335 = sand.u32 %s34, 1
        %s336 = smul.addr %s335, 16
        %s337 = scalar_lea.vmem [#allocation3], %s336
        %p338 = pneg %p47
        %p339 = pneg %p44
        %p340 = scmp.lt.s32.totalorder %s26, 1
        %s341 = scalar_select %p340, %s26, 1
        %s342 = scalar_lea.vmem %s1, %s341
        %p343 = pneg %p73
        %p344 = pneg %p70
        %p345 = pneg %p94
        %p346 = pneg %p91
        %p347 = pneg %p115
        %p348 = pneg %p112
        %p349 = pneg %p136
        %p350 = pneg %p133
        %p351 = pneg %p157
        %p352 = pneg %p154
        %p353 = pneg %p178
        %p354 = pneg %p175
        %p355 = pneg %p199
        %p356 = pneg %p196
        %p357 = pneg %p225
        %p358 = pneg %p222
        %s359 = sand.u32 %s212, 1
        %s360 = scalar_lea.sflag [#allocation5], %s359
        %s361 = sand.u32 %s212, 1
        %s362 = smul.addr %s361, 16
        %s363 = scalar_lea.vmem [#allocation9], %s362
        %p364 = scmp.lt.s32.totalorder %s26, 1
        %s365 = scalar_select %p364, %s26, 1
        %s366 = scalar_lea.vmem %s1, %s365
        %v367 = vld [vmem:[%s320] sm:$0xff]
        %v368 = vld [vmem:[%s320 + $0x8] sm:$0xff]
        %v369 = vld [vmem:[#allocation6] sm:$0xff]
        %v370 = vld [vmem:[#allocation6 + $0x8] sm:$0xff]
        %v371 = vld [vmem:[#allocation6 + $0x10] sm:$0xff]
        %v372 = vld [vmem:[#allocation6 + $0x18] sm:$0xff]
        %v373 = vld [vmem:[#allocation6 + $0x20] sm:$0xff]
        %v374 = vld [vmem:[#allocation6 + $0x28] sm:$0xff]
        %v375 = vld [vmem:[#allocation6 + $0x30] sm:$0xff]
        %v376 = vld [vmem:[#allocation6 + $0x38] sm:$0xff]
        %v377 = vld [vmem:[#allocation6 + $0x40] sm:$0xff]
        %v378 = vld [vmem:[#allocation6 + $0x48] sm:$0xff]
        %v379 = vld [vmem:[#allocation6 + $0x50] sm:$0xff]
        %v380 = vld [vmem:[#allocation6 + $0x58] sm:$0xff]
        %v381 = vld [vmem:[#allocation6 + $0x60] sm:$0xff]
        %v382 = vld [vmem:[#allocation6 + $0x68] sm:$0xff]
        %v383 = vld [vmem:[#allocation6 + $0x70] sm:$0xff]
        %v384 = vld [vmem:[#allocation6 + $0x78] sm:$0xff]
        %v385 = vld [vmem:[#allocation6 + $0x80] sm:$0xff]
        %v386 = vld [vmem:[#allocation6 + $0x88] sm:$0xff]
        %v387 = vld [vmem:[#allocation6 + $0x90] sm:$0xff]
        %v388 = vld [vmem:[#allocation6 + $0x98] sm:$0xff]
        %v389 = vld [vmem:[#allocation6 + $0xa0] sm:$0xff]
        %v390 = vld [vmem:[#allocation6 + $0xa8] sm:$0xff]
        %v391 = vld [vmem:[#allocation6 + $0xb0] sm:$0xff]
        %v392 = vld [vmem:[#allocation6 + $0xb8] sm:$0xff]
        %v393 = vld [vmem:[#allocation6 + $0xc0] sm:$0xff]
        %v394 = vld [vmem:[#allocation6 + $0xc8] sm:$0xff]
        %v395 = vld [vmem:[#allocation6 + $0xd0] sm:$0xff]
        %v396 = vld [vmem:[#allocation6 + $0xd8] sm:$0xff]
        %v397 = vld [vmem:[#allocation6 + $0xe0] sm:$0xff]
        %v398 = vld [vmem:[#allocation6 + $0xe8] sm:$0xff]
        %v399 = vld [vmem:[#allocation6 + $0xf0] sm:$0xff]
        %v400 = vld [vmem:[#allocation6 + $0xf8] sm:$0xff]
        %v401 = vld [vmem:[#allocation6 + $0x100] sm:$0xff]
        %v402 = vld [vmem:[#allocation6 + $0x108] sm:$0xff]
        %v403 = vld [vmem:[#allocation6 + $0x110] sm:$0xff]
        %v404 = vld [vmem:[#allocation6 + $0x118] sm:$0xff]
        %v405 = vld [vmem:[#allocation6 + $0x120] sm:$0xff]
        %v406 = vld [vmem:[#allocation6 + $0x128] sm:$0xff]
        %v407 = vld [vmem:[#allocation6 + $0x130] sm:$0xff]
        %v408 = vld [vmem:[#allocation6 + $0x138] sm:$0xff]
        %v409 = vld [vmem:[#allocation6 + $0x140] sm:$0xff]
        %v410 = vld [vmem:[#allocation6 + $0x148] sm:$0xff]
        %v411 = vld [vmem:[#allocation6 + $0x150] sm:$0xff]
        %v412 = vld [vmem:[#allocation6 + $0x158] sm:$0xff]
        %v413 = vld [vmem:[#allocation6 + $0x160] sm:$0xff]
        %v414 = vld [vmem:[#allocation6 + $0x168] sm:$0xff]
        %v415 = vld [vmem:[#allocation6 + $0x170] sm:$0xff]
        %v416 = vld [vmem:[#allocation6 + $0x178] sm:$0xff]
        %v417 = vld [vmem:[%s3] sm:$0x7]
        %v419 = vlaneseq
        %v420 = vshrl.u32 %v419, 7
        %v421 = vsub.s32 0, %v420
        %v422 = vrot.slane %v417, %v421
        %v423 = vlaneseq
        %v424 = vshrl.u32 %v423, 7
        %v425 = vsub.s32 1, %v424
        %v426 = vrot.slane %v417, %v425
        %v427 = vlaneseq
        %v428 = vshrl.u32 %v427, 7
        %v429 = vsub.s32 2, %v428
        %v430 = vrot.slane %v417, %v429
        %434 = vmatprep.subr.mxu0 %v370
        %435 = vmatpush1.msra.mxu0 %v369
        %436 = vmatprep.subr.mxu0 %v373
        %437 = vmatpush1.msra.mxu0 %v372
        %438 = vmatprep.subr.mxu0 %v376
        %439 = vmatpush1.msra.mxu0 %v375
        %440 = vmatprep.subr.mxu0 %v379
        %441 = vmatpush1.msra.mxu0 %v378
        %442 = vmatprep.subr.mxu0 %v382
        %443 = vmatpush1.msra.mxu0 %v381
        %444 = vmatprep.subr.mxu0 %v385
        %445 = vmatpush1.msra.mxu0 %v384
        %446 = vmatprep.subr.mxu0 %v388
        %447 = vmatpush1.msra.mxu0 %v387
        %448 = vmatprep.subr.mxu0 %v391
        %449 = vmatpush1.msra.mxu0 %v390
        %450 = vmatprep.subr.mxu0 %v394
        %451 = vmatpush1.msra.mxu0 %v393
        %452 = vmatprep.subr.mxu0 %v397
        %453 = vmatpush1.msra.mxu0 %v396
        %454 = vmatprep.subr.mxu0 %v400
        %455 = vmatpush1.msra.mxu0 %v399
        %456 = vmatprep.subr.mxu0 %v403
        %457 = vmatpush1.msra.mxu0 %v402
        %458 = vmatprep.subr.mxu0 %v406
        %459 = vmatpush1.msra.mxu0 %v405
        %460 = vmatprep.subr.mxu0 %v409
        %461 = vmatpush1.msra.mxu0 %v408
        %462 = vmatprep.subr.mxu0 %v412
        %463 = vmatpush1.msra.mxu0 %v411
        %464 = vmatprep.subr.mxu0 %v415
        %465 = vmatpush1.msra.mxu0 %v414
        %466 = vmatprep.subr.mxu0 0.0
        %467 = vmatpush1.msra.mxu0 0.0
        %468 = vmatprep.subr.mxu0 0.0
        %469 = vmatpush1.msra.mxu0 0.0
        %470 = vmatprep.subr.mxu0 0.0
        %471 = vmatpush1.msra.mxu0 0.0
        %472 = vmatprep.subr.mxu0 0.0
        %473 = vmatpush1.msra.mxu0 0.0
        %474 = vmatprep.subr.mxu0 0.0
        %475 = vmatpush1.msra.mxu0 0.0
        %476 = vmatprep.subr.mxu0 0.0
        %477 = vmatpush1.msra.mxu0 0.0
        %478 = vmatprep.subr.mxu0 0.0
        %479 = vmatpush1.msra.mxu0 0.0
        %480 = vmatprep.subr.mxu0 0.0
        %481 = vmatpush1.msra.mxu0 0.0
        %482 = vmatprep.subr.mxu0 0.0
        %483 = vmatpush1.msra.mxu0 0.0
        %484 = vmatprep.subr.mxu0 0.0
        %485 = vmatpush1.msra.mxu0 0.0
        %486 = vmatprep.subr.mxu0 0.0
        %487 = vmatpush1.msra.mxu0 0.0
        %488 = vmatprep.subr.mxu0 0.0
        %489 = vmatpush1.msra.mxu0 0.0
        %490 = vmatprep.subr.mxu0 0.0
        %491 = vmatpush1.msra.mxu0 0.0
        %492 = vmatprep.subr.mxu0 0.0
        %493 = vmatpush1.msra.mxu0 0.0
        %494 = vmatprep.subr.mxu0 0.0
        %495 = vmatpush1.msra.mxu0 0.0
        %496 = vmatprep.subr.mxu0 0.0
        %497 = vmatpush1.msra.mxu0 0.0
        %498 = vmatprep.mubr.f32.mxu0 0.0
        %499 = vmatmul.mubr.f32.gmra.mrb[0].mxu0 %v367
        %v500 = vpop.f32.mrb[0].mxu0
        %v501 = vadd.f32 %v422, %v500
        %v502 = vpop.f32.mrb[0].mxu0
        %v503 = vadd.f32 %v426, %v502
        %504 = vmatprep.mubr.f32.mxu0 0.0
        %505 = vmatmul.mubr.f32.gmra.mrb[0].mxu0 %v368
        %v506 = vpop.f32.mrb[0].mxu0
        %v507 = vadd.f32 %v422, %v506
        %v508 = vpop.f32.mrb[0].mxu0
        %v509 = vadd.f32 %v426, %v508
        %510 = vdwg.mxu0
        %511 = vmatprep.subr.mxu0 0.0
        %512 = vmatpush1.msra.mxu0 %v371
        %513 = vmatprep.subr.mxu0 0.0
        %514 = vmatpush1.msra.mxu0 %v374
        %515 = vmatprep.subr.mxu0 0.0
        %516 = vmatpush1.msra.mxu0 %v377
        %517 = vmatprep.subr.mxu0 0.0
        %518 = vmatpush1.msra.mxu0 %v380
        %519 = vmatprep.subr.mxu0 0.0
        %520 = vmatpush1.msra.mxu0 %v383
        %521 = vmatprep.subr.mxu0 0.0
        %522 = vmatpush1.msra.mxu0 %v386
        %523 = vmatprep.subr.mxu0 0.0
        %524 = vmatpush1.msra.mxu0 %v389
        %525 = vmatprep.subr.mxu0 0.0
        %526 = vmatpush1.msra.mxu0 %v392
        %527 = vmatprep.subr.mxu0 0.0
        %528 = vmatpush1.msra.mxu0 %v395
        %529 = vmatprep.subr.mxu0 0.0
        %530 = vmatpush1.msra.mxu0 %v398
        %531 = vmatprep.subr.mxu0 0.0
        %532 = vmatpush1.msra.mxu0 %v401
        %533 = vmatprep.subr.mxu0 0.0
        %534 = vmatpush1.msra.mxu0 %v404
        %535 = vmatprep.subr.mxu0 0.0
        %536 = vmatpush1.msra.mxu0 %v407
        %537 = vmatprep.subr.mxu0 0.0
        %538 = vmatpush1.msra.mxu0 %v410
        %539 = vmatprep.subr.mxu0 0.0
        %540 = vmatpush1.msra.mxu0 %v413
        %541 = vmatprep.subr.mxu0 0.0
        %542 = vmatpush1.msra.mxu0 %v416
        %543 = vmatprep.subr.mxu0 0.0
        %544 = vmatpush1.msra.mxu0 0.0
        %545 = vmatprep.subr.mxu0 0.0
        %546 = vmatpush1.msra.mxu0 0.0
        %547 = vmatprep.subr.mxu0 0.0
        %548 = vmatpush1.msra.mxu0 0.0
        %549 = vmatprep.subr.mxu0 0.0
        %550 = vmatpush1.msra.mxu0 0.0
        %551 = vmatprep.subr.mxu0 0.0
        %552 = vmatpush1.msra.mxu0 0.0
        %553 = vmatprep.subr.mxu0 0.0
        %554 = vmatpush1.msra.mxu0 0.0
        %555 = vmatprep.subr.mxu0 0.0
        %556 = vmatpush1.msra.mxu0 0.0
        %557 = vmatprep.subr.mxu0 0.0
        %558 = vmatpush1.msra.mxu0 0.0
        %559 = vmatprep.subr.mxu0 0.0
        %560 = vmatpush1.msra.mxu0 0.0
        %561 = vmatprep.subr.mxu0 0.0
        %562 = vmatpush1.msra.mxu0 0.0
        %563 = vmatprep.subr.mxu0 0.0
        %564 = vmatpush1.msra.mxu0 0.0
        %565 = vmatprep.subr.mxu0 0.0
        %566 = vmatpush1.msra.mxu0 0.0
        %567 = vmatprep.subr.mxu0 0.0
        %568 = vmatpush1.msra.mxu0 0.0
        %569 = vmatprep.subr.mxu0 0.0
        %570 = vmatpush1.msra.mxu0 0.0
        %571 = vmatprep.subr.mxu0 0.0
        %572 = vmatpush1.msra.mxu0 0.0
        %573 = vmatprep.subr.mxu0 0.0
        %574 = vmatpush1.msra.mxu0 0.0
        %575 = vmatprep.mubr.f32.mxu0 0.0
        %576 = vmatmul.mubr.f32.gmra.mrb[0].mxu0 %v367
        %v577 = vpop.f32.mrb[0].mxu0
        %v578 = vadd.f32 %v430, %v577
        %v579 = vpop.f32.mrb[0].mxu0
        %580 = vmatprep.mubr.f32.mxu0 0.0
        %581 = vmatmul.mubr.f32.gmra.mrb[0].mxu0 %v368
        %v582 = vpop.f32.mrb[0].mxu0
        %v583 = vadd.f32 %v430, %v582
        %v584 = vpop.f32.mrb[0].mxu0
        %585 = vdwg.mxu0
        %v586 = vld [vmem:[%s366] sm:$0x1]
        %vm587 = vcmask 261120
        %v589 = vsel %vm587, %v501, 0
        %v592 = vsel %vm587, %v507, 0
        %v595 = vsel %vm587, %v503, 0
        %v598 = vsel %vm587, %v509, 0
        %600 = vmatprep.subr.mxu0 0.0
        %601 = vmatpush1.xpose.msra.mxu0 %v595
        %602 = vmatprep.subr.mxu0 0.0
        %603 = vmatpush1.xpose.msra.mxu0 %v598
        %604 = vmatprep.subr.mxu0 0.0
        %605 = vmatpush1.xpose.msra.mxu0 0.0
        %606 = vmatprep.subr.mxu0 0.0
        %607 = vmatpush1.xpose.msra.mxu0 0.0
        %608 = vmatprep.subr.mxu0 0.0
        %609 = vmatpush1.xpose.msra.mxu0 0.0
        %610 = vmatprep.subr.mxu0 0.0
        %611 = vmatpush1.xpose.msra.mxu0 0.0
        %612 = vmatprep.subr.mxu0 0.0
        %613 = vmatpush1.xpose.msra.mxu0 0.0
        %614 = vmatprep.subr.mxu0 0.0
        %615 = vmatpush1.xpose.msra.mxu0 0.0
        %616 = vmatprep.subr.mxu0 0.0
        %617 = vmatpush1.xpose.msra.mxu0 0.0
        %618 = vmatprep.subr.mxu0 0.0
        %619 = vmatpush1.xpose.msra.mxu0 0.0
        %620 = vmatprep.subr.mxu0 0.0
        %621 = vmatpush1.xpose.msra.mxu0 0.0
        %622 = vmatprep.subr.mxu0 0.0
        %623 = vmatpush1.xpose.msra.mxu0 0.0
        %624 = vmatprep.subr.mxu0 0.0
        %625 = vmatpush1.xpose.msra.mxu0 0.0
        %626 = vmatprep.subr.mxu0 0.0
        %627 = vmatpush1.xpose.msra.mxu0 0.0
        %628 = vmatprep.subr.mxu0 0.0
        %629 = vmatpush1.xpose.msra.mxu0 0.0
        %630 = vmatprep.subr.mxu0 0.0
        %631 = vmatpush1.xpose.msra.mxu0 0.0
        %632 = vmatprep.subr.mxu0 0.0
        %633 = vmatpush1.xpose.msra.mxu0 0.0
        %634 = vmatprep.subr.mxu0 0.0
        %635 = vmatpush1.xpose.msra.mxu0 0.0
        %636 = vmatprep.subr.mxu0 0.0
        %637 = vmatpush1.xpose.msra.mxu0 0.0
        %638 = vmatprep.subr.mxu0 0.0
        %639 = vmatpush1.xpose.msra.mxu0 0.0
        %640 = vmatprep.subr.mxu0 0.0
        %641 = vmatpush1.xpose.msra.mxu0 0.0
        %642 = vmatprep.subr.mxu0 0.0
        %643 = vmatpush1.xpose.msra.mxu0 0.0
        %644 = vmatprep.subr.mxu0 0.0
        %645 = vmatpush1.xpose.msra.mxu0 0.0
        %646 = vmatprep.subr.mxu0 0.0
        %647 = vmatpush1.xpose.msra.mxu0 0.0
        %648 = vmatprep.subr.mxu0 0.0
        %649 = vmatpush1.xpose.msra.mxu0 0.0
        %650 = vmatprep.subr.mxu0 0.0
        %651 = vmatpush1.xpose.msra.mxu0 0.0
        %652 = vmatprep.subr.mxu0 0.0
        %653 = vmatpush1.xpose.msra.mxu0 0.0
        %654 = vmatprep.subr.mxu0 0.0
        %655 = vmatpush1.xpose.msra.mxu0 0.0
        %656 = vmatprep.subr.mxu0 0.0
        %657 = vmatpush1.xpose.msra.mxu0 0.0
        %658 = vmatprep.subr.mxu0 0.0
        %659 = vmatpush1.xpose.msra.mxu0 0.0
        %660 = vmatprep.subr.mxu0 0.0
        %661 = vmatpush1.xpose.msra.mxu0 0.0
        %662 = vmatprep.subr.mxu0 0.0
        %663 = vmatpush1.xpose.msra.mxu0 0.0
        %664 = vmatprep.mubr.f32.mxu0 0.0
        %665 = vmatmul.mubr.f32.gmra.mrb[0].mxu0 %v589
        %v666 = vpop.f32.mrb[0].mxu0
        %v667 = vadd.f32 0.0, %v666
        %v668 = vpop.f32.mrb[0].mxu0
        %669 = vmatprep.mubr.f32.mxu0 0.0
        %670 = vmatmul.mubr.f32.gmra.mrb[0].mxu0 %v592
        %v671 = vpop.f32.mrb[0].mxu0
        %v672 = vadd.f32 0.0, %v671
        %v673 = vpop.f32.mrb[0].mxu0
        %674 = vdwg.mxu0
        %v675 = vmul.f32 %v667, 0.17677669
        %v676 = vmul.f32 %v672, 0.17677669
        %v678 = vlaneseq
        %v679 = vshrl.u32 %v678, 7
        %v680 = vsub.s32 0, %v679
        %v681 = vrot.slane %v586, %v680
        %v683 = vadd.f32 %v675, %v681
        %v684 = vadd.f32 %v676, %v681
        %vm685 = vcmask 130048
        %v686 = vsel %vm685, %v683, -inf
        %687 = vmax.xlane.f32.xlu0 %v686
        %v688 = vpop.xlane.xlu0 %687
        %v689 = vsel %vm685, %v684, -inf
        %690 = vmax.xlane.f32.xlu0 %v689
        %v691 = vpop.xlane.xlu0 %690
        %v692 = vsub.f32 %v683, %v688
        %v693 = vsub.f32 %v684, %v691
        %v694 = vmul.f32 %v692, 1.442695
        %v695 = vpow.pop %v694
        %v696 = vmul.f32 %v693, 1.442695
        %v697 = vpow.pop %v696
        %v698 = vsel %vm685, %v695, 0.0
        %699 = vadd.xlane.f32.xlu0 %v698
        %v700 = vpop.xlane.xlu0 %699
        %v701 = vsel %vm685, %v697, 0.0
        %702 = vadd.xlane.f32.xlu0 %v701
        %v703 = vpop.xlane.xlu0 %702
        %v704 = vrcp.pop %v700
        %v705 = vrcp.pop %v703
        %v706 = vmul.f32 %v695, %v704
        %v707 = vmul.f32 %v697, %v705
        %v709 = vsel %vm685, %v706, 0
        %v712 = vsel %vm685, %v707, 0
        %714 = vmatprep.subr.mxu0 0.0
        %715 = vmatpush1.msra.mxu0 %v578
        %716 = vmatprep.subr.mxu0 0.0
        %717 = vmatpush1.msra.mxu0 %v583
        %718 = vmatprep.subr.mxu0 0.0
        %719 = vmatpush1.msra.mxu0 0.0
        %720 = vmatprep.subr.mxu0 0.0
        %721 = vmatpush1.msra.mxu0 0.0
        %722 = vmatprep.subr.mxu0 0.0
        %723 = vmatpush1.msra.mxu0 0.0
        %724 = vmatprep.subr.mxu0 0.0
        %725 = vmatpush1.msra.mxu0 0.0
        %726 = vmatprep.subr.mxu0 0.0
        %727 = vmatpush1.msra.mxu0 0.0
        %728 = vmatprep.subr.mxu0 0.0
        %729 = vmatpush1.msra.mxu0 0.0
        %730 = vmatprep.subr.mxu0 0.0
        %731 = vmatpush1.msra.mxu0 0.0
        %732 = vmatprep.subr.mxu0 0.0
        %733 = vmatpush1.msra.mxu0 0.0
        %734 = vmatprep.subr.mxu0 0.0
        %735 = vmatpush1.msra.mxu0 0.0
        %736 = vmatprep.subr.mxu0 0.0
        %737 = vmatpush1.msra.mxu0 0.0
        %738 = vmatprep.subr.mxu0 0.0
        %739 = vmatpush1.msra.mxu0 0.0
        %740 = vmatprep.subr.mxu0 0.0
        %741 = vmatpush1.msra.mxu0 0.0
        %742 = vmatprep.subr.mxu0 0.0
        %743 = vmatpush1.msra.mxu0 0.0
        %744 = vmatprep.subr.mxu0 0.0
        %745 = vmatpush1.msra.mxu0 0.0
        %746 = vmatprep.subr.mxu0 0.0
        %747 = vmatpush1.msra.mxu0 0.0
        %748 = vmatprep.subr.mxu0 0.0
        %749 = vmatpush1.msra.mxu0 0.0
        %750 = vmatprep.subr.mxu0 0.0
        %751 = vmatpush1.msra.mxu0 0.0
        %752 = vmatprep.subr.mxu0 0.0
        %753 = vmatpush1.msra.mxu0 0.0
        %754 = vmatprep.subr.mxu0 0.0
        %755 = vmatpush1.msra.mxu0 0.0
        %756 = vmatprep.subr.mxu0 0.0
        %757 = vmatpush1.msra.mxu0 0.0
        %758 = vmatprep.subr.mxu0 0.0
        %759 = vmatpush1.msra.mxu0 0.0
        %760 = vmatprep.subr.mxu0 0.0
        %761 = vmatpush1.msra.mxu0 0.0
        %762 = vmatprep.subr.mxu0 0.0
        %763 = vmatpush1.msra.mxu0 0.0
        %764 = vmatprep.subr.mxu0 0.0
        %765 = vmatpush1.msra.mxu0 0.0
        %766 = vmatprep.subr.mxu0 0.0
        %767 = vmatpush1.msra.mxu0 0.0
        %768 = vmatprep.subr.mxu0 0.0
        %769 = vmatpush1.msra.mxu0 0.0
        %770 = vmatprep.subr.mxu0 0.0
        %771 = vmatpush1.msra.mxu0 0.0
        %772 = vmatprep.subr.mxu0 0.0
        %773 = vmatpush1.msra.mxu0 0.0
        %774 = vmatprep.subr.mxu0 0.0
        %775 = vmatpush1.msra.mxu0 0.0
        %776 = vmatprep.subr.mxu0 0.0
        %777 = vmatpush1.msra.mxu0 0.0
        %778 = vmatprep.mubr.f32.mxu0 0.0
        %779 = vmatmul.mubr.f32.gmra.mrb[0].mxu0 %v709
        %v780 = vpop.f32.mrb[0].mxu0
        %v781 = vadd.f32 0.0, %v780
        %v782 = vpop.f32.mrb[0].mxu0
        %783 = vmatprep.mubr.f32.mxu0 0.0
        %784 = vmatmul.mubr.f32.gmra.mrb[0].mxu0 %v712
        %v785 = vpop.f32.mrb[0].mxu0
        %v786 = vadd.f32 0.0, %v785
        %v787 = vpop.f32.mrb[0].mxu0
        %788 = vdwg.mxu0
        %789 = vst.msk [vmem:[#allocation2] sm:$0xff] %vm587, %v781
        %790 = vst.msk [vmem:[#allocation2 + $0x8] sm:$0xff] %vm587, %v786
        %791 = vrot.lane.b32.xlu0 %v501, 96
        %v792 = vpop.permute.xlu0 %791
        %793 = vrot.lane.b32.xlu0 %v507, 96
        %v794 = vpop.permute.xlu0 %793
        %795 = vrot.lane.b32.xlu0 %v503, 96
        %v796 = vpop.permute.xlu0 %795
        %797 = vrot.lane.b32.xlu0 %v509, 96
        %v798 = vpop.permute.xlu0 %797
        %v799 = vsel %vm587, %v792, 0
        %v801 = vsel %vm587, %v794, 0
        %v803 = vsel %vm587, %v796, 0
        %v805 = vsel %vm587, %v798, 0
        %807 = vmatprep.subr.mxu0 0.0
        %808 = vmatpush1.xpose.msra.mxu0 %v803
        %809 = vmatprep.subr.mxu0 0.0
        %810 = vmatpush1.xpose.msra.mxu0 %v805
        %811 = vmatprep.subr.mxu0 0.0
        %812 = vmatpush1.xpose.msra.mxu0 0.0
        %813 = vmatprep.subr.mxu0 0.0
        %814 = vmatpush1.xpose.msra.mxu0 0.0
        %815 = vmatprep.subr.mxu0 0.0
        %816 = vmatpush1.xpose.msra.mxu0 0.0
        %817 = vmatprep.subr.mxu0 0.0
        %818 = vmatpush1.xpose.msra.mxu0 0.0
        %819 = vmatprep.subr.mxu0 0.0
        %820 = vmatpush1.xpose.msra.mxu0 0.0
        %821 = vmatprep.subr.mxu0 0.0
        %822 = vmatpush1.xpose.msra.mxu0 0.0
        %823 = vmatprep.subr.mxu0 0.0
        %824 = vmatpush1.xpose.msra.mxu0 0.0
        %825 = vmatprep.subr.mxu0 0.0
        %826 = vmatpush1.xpose.msra.mxu0 0.0
        %827 = vmatprep.subr.mxu0 0.0
        %828 = vmatpush1.xpose.msra.mxu0 0.0
        %829 = vmatprep.subr.mxu0 0.0
        %830 = vmatpush1.xpose.msra.mxu0 0.0
        %831 = vmatprep.subr.mxu0 0.0
        %832 = vmatpush1.xpose.msra.mxu0 0.0
        %833 = vmatprep.subr.mxu0 0.0
        %834 = vmatpush1.xpose.msra.mxu0 0.0
        %835 = vmatprep.subr.mxu0 0.0
        %836 = vmatpush1.xpose.msra.mxu0 0.0
        %837 = vmatprep.subr.mxu0 0.0
        %838 = vmatpush1.xpose.msra.mxu0 0.0
        %839 = vmatprep.subr.mxu0 0.0
        %840 = vmatpush1.xpose.msra.mxu0 0.0
        %841 = vmatprep.subr.mxu0 0.0
        %842 = vmatpush1.xpose.msra.mxu0 0.0
        %843 = vmatprep.subr.mxu0 0.0
        %844 = vmatpush1.xpose.msra.mxu0 0.0
        %845 = vmatprep.subr.mxu0 0.0
        %846 = vmatpush1.xpose.msra.mxu0 0.0
        %847 = vmatprep.subr.mxu0 0.0
        %848 = vmatpush1.xpose.msra.mxu0 0.0
        %849 = vmatprep.subr.mxu0 0.0
        %850 = vmatpush1.xpose.msra.mxu0 0.0
        %851 = vmatprep.subr.mxu0 0.0
        %852 = vmatpush1.xpose.msra.mxu0 0.0
        %853 = vmatprep.subr.mxu0 0.0
        %854 = vmatpush1.xpose.msra.mxu0 0.0
        %855 = vmatprep.subr.mxu0 0.0
        %856 = vmatpush1.xpose.msra.mxu0 0.0
        %857 = vmatprep.subr.mxu0 0.0
        %858 = vmatpush1.xpose.msra.mxu0 0.0
        %859 = vmatprep.subr.mxu0 0.0
        %860 = vmatpush1.xpose.msra.mxu0 0.0
        %861 = vmatprep.subr.mxu0 0.0
        %862 = vmatpush1.xpose.msra.mxu0 0.0
        %863 = vmatprep.subr.mxu0 0.0
        %864 = vmatpush1.xpose.msra.mxu0 0.0
        %865 = vmatprep.subr.mxu0 0.0
        %866 = vmatpush1.xpose.msra.mxu0 0.0
        %867 = vmatprep.subr.mxu0 0.0
        %868 = vmatpush1.xpose.msra.mxu0 0.0
        %869 = vmatprep.subr.mxu0 0.0
        %870 = vmatpush1.xpose.msra.mxu0 0.0
        %871 = vmatprep.mubr.f32.mxu0 0.0
        %872 = vmatmul.mubr.f32.gmra.mrb[0].mxu0 %v799
        %v873 = vpop.f32.mrb[0].mxu0
        %v874 = vadd.f32 0.0, %v873
        %v875 = vpop.f32.mrb[0].mxu0
        %876 = vmatprep.mubr.f32.mxu0 0.0
        %877 = vmatmul.mubr.f32.gmra.mrb[0].mxu0 %v801
        %v878 = vpop.f32.mrb[0].mxu0
        %v879 = vadd.f32 0.0, %v878
        %v880 = vpop.f32.mrb[0].mxu0
        %881 = vdwg.mxu0
        %v882 = vmul.f32 %v874, 0.17677669
        %v883 = vmul.f32 %v879, 0.17677669
        %v884 = vadd.f32 %v882, %v681
        %v885 = vadd.f32 %v883, %v681
        %v886 = vsel %vm685, %v884, -inf
        %887 = vmax.xlane.f32.xlu0 %v886
        %v888 = vpop.xlane.xlu0 %887
        %v889 = vsel %vm685, %v885, -inf
        %890 = vmax.xlane.f32.xlu0 %v889
        %v891 = vpop.xlane.xlu0 %890
        %v892 = vsub.f32 %v884, %v888
        %v893 = vsub.f32 %v885, %v891
        %v894 = vmul.f32 %v892, 1.442695
        %v895 = vpow.pop %v894
        %v896 = vmul.f32 %v893, 1.442695
        %v897 = vpow.pop %v896
        %v898 = vsel %vm685, %v895, 0.0
        %899 = vadd.xlane.f32.xlu0 %v898
        %v900 = vpop.xlane.xlu0 %899
        %v901 = vsel %vm685, %v897, 0.0
        %902 = vadd.xlane.f32.xlu0 %v901
        %v903 = vpop.xlane.xlu0 %902
        %v904 = vrcp.pop %v900
        %v905 = vrcp.pop %v903
        %v906 = vmul.f32 %v895, %v904
        %v907 = vmul.f32 %v897, %v905
        %910 = vrot.lane.b32.xlu0 %v578, 96
        %v911 = vpop.permute.xlu0 %910
        %912 = vrot.lane.b32.xlu0 %v583, 96
        %v913 = vpop.permute.xlu0 %912
        %v917 = vsel %vm685, %v906, 0
        %v920 = vsel %vm685, %v907, 0
        %922 = vmatprep.subr.mxu0 0.0
        %923 = vmatpush1.msra.mxu0 %v911
        %924 = vmatprep.subr.mxu0 0.0
        %925 = vmatpush1.msra.mxu0 %v913
        %926 = vmatprep.subr.mxu0 0.0
        %927 = vmatpush1.msra.mxu0 0.0
        %928 = vmatprep.subr.mxu0 0.0
        %929 = vmatpush1.msra.mxu0 0.0
        %930 = vmatprep.subr.mxu0 0.0
        %931 = vmatpush1.msra.mxu0 0.0
        %932 = vmatprep.subr.mxu0 0.0
        %933 = vmatpush1.msra.mxu0 0.0
        %934 = vmatprep.subr.mxu0 0.0
        %935 = vmatpush1.msra.mxu0 0.0
        %936 = vmatprep.subr.mxu0 0.0
        %937 = vmatpush1.msra.mxu0 0.0
        %938 = vmatprep.subr.mxu0 0.0
        %939 = vmatpush1.msra.mxu0 0.0
        %940 = vmatprep.subr.mxu0 0.0
        %941 = vmatpush1.msra.mxu0 0.0
        %942 = vmatprep.subr.mxu0 0.0
        %943 = vmatpush1.msra.mxu0 0.0
        %944 = vmatprep.subr.mxu0 0.0
        %945 = vmatpush1.msra.mxu0 0.0
        %946 = vmatprep.subr.mxu0 0.0
        %947 = vmatpush1.msra.mxu0 0.0
        %948 = vmatprep.subr.mxu0 0.0
        %949 = vmatpush1.msra.mxu0 0.0
        %950 = vmatprep.subr.mxu0 0.0
        %951 = vmatpush1.msra.mxu0 0.0
        %952 = vmatprep.subr.mxu0 0.0
        %953 = vmatpush1.msra.mxu0 0.0
        %954 = vmatprep.subr.mxu0 0.0
        %955 = vmatpush1.msra.mxu0 0.0
        %956 = vmatprep.subr.mxu0 0.0
        %957 = vmatpush1.msra.mxu0 0.0
        %958 = vmatprep.subr.mxu0 0.0
        %959 = vmatpush1.msra.mxu0 0.0
        %960 = vmatprep.subr.mxu0 0.0
        %961 = vmatpush1.msra.mxu0 0.0
        %962 = vmatprep.subr.mxu0 0.0
        %963 = vmatpush1.msra.mxu0 0.0
        %964 = vmatprep.subr.mxu0 0.0
        %965 = vmatpush1.msra.mxu0 0.0
        %966 = vmatprep.subr.mxu0 0.0
        %967 = vmatpush1.msra.mxu0 0.0
        %968 = vmatprep.subr.mxu0 0.0
        %969 = vmatpush1.msra.mxu0 0.0
        %970 = vmatprep.subr.mxu0 0.0
        %971 = vmatpush1.msra.mxu0 0.0
        %972 = vmatprep.subr.mxu0 0.0
        %973 = vmatpush1.msra.mxu0 0.0
        %974 = vmatprep.subr.mxu0 0.0
        %975 = vmatpush1.msra.mxu0 0.0
        %976 = vmatprep.subr.mxu0 0.0
        %977 = vmatpush1.msra.mxu0 0.0
        %978 = vmatprep.subr.mxu0 0.0
        %979 = vmatpush1.msra.mxu0 0.0
        %980 = vmatprep.subr.mxu0 0.0
        %981 = vmatpush1.msra.mxu0 0.0
        %982 = vmatprep.subr.mxu0 0.0
        %983 = vmatpush1.msra.mxu0 0.0
        %984 = vmatprep.subr.mxu0 0.0
        %985 = vmatpush1.msra.mxu0 0.0
        %986 = vmatprep.mubr.f32.mxu0 0.0
        %987 = vmatmul.mubr.f32.gmra.mrb[0].mxu0 %v917
        %v988 = vpop.f32.mrb[0].mxu0
        %v989 = vadd.f32 0.0, %v988
        %v990 = vpop.f32.mrb[0].mxu0
        %991 = vmatprep.mubr.f32.mxu0 0.0
        %992 = vmatmul.mubr.f32.gmra.mrb[0].mxu0 %v920
        %v993 = vpop.f32.mrb[0].mxu0
        %v994 = vadd.f32 0.0, %v993
        %v995 = vpop.f32.mrb[0].mxu0
        %996 = vdwg.mxu0
        %999 = vrot.lane.b32.xlu0 %v989, 32
        %v1000 = vpop.permute.xlu0 %999
        %1001 = vrot.lane.b32.xlu0 %v994, 32
        %v1002 = vpop.permute.xlu0 %1001
        %vm1005 = vcmask 523520
        %1006 = vst.msk [vmem:[#allocation2] sm:$0xff] %vm1005, %v1000
        %1007 = vst.msk [vmem:[#allocation2 + $0x8] sm:$0xff] %vm1005, %v1002
        %1008 = vrot.lane.b32.xlu0 %v501, 64
        %v1009 = vpop.permute.xlu0 %1008
        %1010 = vrot.lane.b32.xlu0 %v507, 64
        %v1011 = vpop.permute.xlu0 %1010
        %1012 = vrot.lane.b32.xlu0 %v503, 64
        %v1013 = vpop.permute.xlu0 %1012
        %1014 = vrot.lane.b32.xlu0 %v509, 64
        %v1015 = vpop.permute.xlu0 %1014
        %v1016 = vsel %vm587, %v1009, 0
        %v1018 = vsel %vm587, %v1011, 0
        %v1020 = vsel %vm587, %v1013, 0
        %v1022 = vsel %vm587, %v1015, 0
        %1024 = vmatprep.subr.mxu0 0.0
        %1025 = vmatpush1.xpose.msra.mxu0 %v1020
        %1026 = vmatprep.subr.mxu0 0.0
        %1027 = vmatpush1.xpose.msra.mxu0 %v1022
        %1028 = vmatprep.subr.mxu0 0.0
        %1029 = vmatpush1.xpose.msra.mxu0 0.0
        %1030 = vmatprep.subr.mxu0 0.0
        %1031 = vmatpush1.xpose.msra.mxu0 0.0
        %1032 = vmatprep.subr.mxu0 0.0
        %1033 = vmatpush1.xpose.msra.mxu0 0.0
        %1034 = vmatprep.subr.mxu0 0.0
        %1035 = vmatpush1.xpose.msra.mxu0 0.0
        %1036 = vmatprep.subr.mxu0 0.0
        %1037 = vmatpush1.xpose.msra.mxu0 0.0
        %1038 = vmatprep.subr.mxu0 0.0
        %1039 = vmatpush1.xpose.msra.mxu0 0.0
        %1040 = vmatprep.subr.mxu0 0.0
        %1041 = vmatpush1.xpose.msra.mxu0 0.0
        %1042 = vmatprep.subr.mxu0 0.0
        %1043 = vmatpush1.xpose.msra.mxu0 0.0
        %1044 = vmatprep.subr.mxu0 0.0
        %1045 = vmatpush1.xpose.msra.mxu0 0.0
        %1046 = vmatprep.subr.mxu0 0.0
        %1047 = vmatpush1.xpose.msra.mxu0 0.0
        %1048 = vmatprep.subr.mxu0 0.0
        %1049 = vmatpush1.xpose.msra.mxu0 0.0
        %1050 = vmatprep.subr.mxu0 0.0
        %1051 = vmatpush1.xpose.msra.mxu0 0.0
        %1052 = vmatprep.subr.mxu0 0.0
        %1053 = vmatpush1.xpose.msra.mxu0 0.0
        %1054 = vmatprep.subr.mxu0 0.0
        %1055 = vmatpush1.xpose.msra.mxu0 0.0
        %1056 = vmatprep.subr.mxu0 0.0
        %1057 = vmatpush1.xpose.msra.mxu0 0.0
        %1058 = vmatprep.subr.mxu0 0.0
        %1059 = vmatpush1.xpose.msra.mxu0 0.0
        %1060 = vmatprep.subr.mxu0 0.0
        %1061 = vmatpush1.xpose.msra.mxu0 0.0
        %1062 = vmatprep.subr.mxu0 0.0
        %1063 = vmatpush1.xpose.msra.mxu0 0.0
        %1064 = vmatprep.subr.mxu0 0.0
        %1065 = vmatpush1.xpose.msra.mxu0 0.0
        %1066 = vmatprep.subr.mxu0 0.0
        %1067 = vmatpush1.xpose.msra.mxu0 0.0
        %1068 = vmatprep.subr.mxu0 0.0
        %1069 = vmatpush1.xpose.msra.mxu0 0.0
        %1070 = vmatprep.subr.mxu0 0.0
        %1071 = vmatpush1.xpose.msra.mxu0 0.0
        %1072 = vmatprep.subr.mxu0 0.0
        %1073 = vmatpush1.xpose.msra.mxu0 0.0
        %1074 = vmatprep.subr.mxu0 0.0
        %1075 = vmatpush1.xpose.msra.mxu0 0.0
        %1076 = vmatprep.subr.mxu0 0.0
        %1077 = vmatpush1.xpose.msra.mxu0 0.0
        %1078 = vmatprep.subr.mxu0 0.0
        %1079 = vmatpush1.xpose.msra.mxu0 0.0
        %1080 = vmatprep.subr.mxu0 0.0
        %1081 = vmatpush1.xpose.msra.mxu0 0.0
        %1082 = vmatprep.subr.mxu0 0.0
        %1083 = vmatpush1.xpose.msra.mxu0 0.0
        %1084 = vmatprep.subr.mxu0 0.0
        %1085 = vmatpush1.xpose.msra.mxu0 0.0
        %1086 = vmatprep.subr.mxu0 0.0
        %1087 = vmatpush1.xpose.msra.mxu0 0.0
        %1088 = vmatprep.mubr.f32.mxu0 0.0
        %1089 = vmatmul.mubr.f32.gmra.mrb[0].mxu0 %v1016
        %v1090 = vpop.f32.mrb[0].mxu0
        %v1091 = vadd.f32 0.0, %v1090
        %v1092 = vpop.f32.mrb[0].mxu0
        %1093 = vmatprep.mubr.f32.mxu0 0.0
        %1094 = vmatmul.mubr.f32.gmra.mrb[0].mxu0 %v1018
        %v1095 = vpop.f32.mrb[0].mxu0
        %v1096 = vadd.f32 0.0, %v1095
        %v1097 = vpop.f32.mrb[0].mxu0
        %1098 = vdwg.mxu0
        %v1099 = vmul.f32 %v1091, 0.17677669
        %v1100 = vmul.f32 %v1096, 0.17677669
        %v1101 = vadd.f32 %v1099, %v681
        %v1102 = vadd.f32 %v1100, %v681
        %v1103 = vsel %vm685, %v1101, -inf
        %1104 = vmax.xlane.f32.xlu0 %v1103
        %v1105 = vpop.xlane.xlu0 %1104
        %v1106 = vsel %vm685, %v1102, -inf
        %1107 = vmax.xlane.f32.xlu0 %v1106
        %v1108 = vpop.xlane.xlu0 %1107
        %v1109 = vsub.f32 %v1101, %v1105
        %v1110 = vsub.f32 %v1102, %v1108
        %v1111 = vmul.f32 %v1109, 1.442695
        %v1112 = vpow.pop %v1111
        %v1113 = vmul.f32 %v1110, 1.442695
        %v1114 = vpow.pop %v1113
        %v1115 = vsel %vm685, %v1112, 0.0
        %1116 = vadd.xlane.f32.xlu0 %v1115
        %v1117 = vpop.xlane.xlu0 %1116
        %v1118 = vsel %vm685, %v1114, 0.0
        %1119 = vadd.xlane.f32.xlu0 %v1118
        %v1120 = vpop.xlane.xlu0 %1119
        %v1121 = vrcp.pop %v1117
        %v1122 = vrcp.pop %v1120
        %v1123 = vmul.f32 %v1112, %v1121
        %v1124 = vmul.f32 %v1114, %v1122
        %1125 = vrot.lane.b32.xlu0 %v578, 64
        %v1126 = vpop.permute.xlu0 %1125
        %1127 = vrot.lane.b32.xlu0 %v583, 64
        %v1128 = vpop.permute.xlu0 %1127
        %v1132 = vsel %vm685, %v1123, 0
        %v1135 = vsel %vm685, %v1124, 0
        %1137 = vmatprep.subr.mxu0 0.0
        %1138 = vmatpush1.msra.mxu0 %v1126
        %1139 = vmatprep.subr.mxu0 0.0
        %1140 = vmatpush1.msra.mxu0 %v1128
        %1141 = vmatprep.subr.mxu0 0.0
        %1142 = vmatpush1.msra.mxu0 0.0
        %1143 = vmatprep.subr.mxu0 0.0
        %1144 = vmatpush1.msra.mxu0 0.0
        %1145 = vmatprep.subr.mxu0 0.0
        %1146 = vmatpush1.msra.mxu0 0.0
        %1147 = vmatprep.subr.mxu0 0.0
        %1148 = vmatpush1.msra.mxu0 0.0
        %1149 = vmatprep.subr.mxu0 0.0
        %1150 = vmatpush1.msra.mxu0 0.0
        %1151 = vmatprep.subr.mxu0 0.0
        %1152 = vmatpush1.msra.mxu0 0.0
        %1153 = vmatprep.subr.mxu0 0.0
        %1154 = vmatpush1.msra.mxu0 0.0
        %1155 = vmatprep.subr.mxu0 0.0
        %1156 = vmatpush1.msra.mxu0 0.0
        %1157 = vmatprep.subr.mxu0 0.0
        %1158 = vmatpush1.msra.mxu0 0.0
        %1159 = vmatprep.subr.mxu0 0.0
        %1160 = vmatpush1.msra.mxu0 0.0
        %1161 = vmatprep.subr.mxu0 0.0
        %1162 = vmatpush1.msra.mxu0 0.0
        %1163 = vmatprep.subr.mxu0 0.0
        %1164 = vmatpush1.msra.mxu0 0.0
        %1165 = vmatprep.subr.mxu0 0.0
        %1166 = vmatpush1.msra.mxu0 0.0
        %1167 = vmatprep.subr.mxu0 0.0
        %1168 = vmatpush1.msra.mxu0 0.0
        %1169 = vmatprep.subr.mxu0 0.0
        %1170 = vmatpush1.msra.mxu0 0.0
        %1171 = vmatprep.subr.mxu0 0.0
        %1172 = vmatpush1.msra.mxu0 0.0
        %1173 = vmatprep.subr.mxu0 0.0
        %1174 = vmatpush1.msra.mxu0 0.0
        %1175 = vmatprep.subr.mxu0 0.0
        %1176 = vmatpush1.msra.mxu0 0.0
        %1177 = vmatprep.subr.mxu0 0.0
        %1178 = vmatpush1.msra.mxu0 0.0
        %1179 = vmatprep.subr.mxu0 0.0
        %1180 = vmatpush1.msra.mxu0 0.0
        %1181 = vmatprep.subr.mxu0 0.0
        %1182 = vmatpush1.msra.mxu0 0.0
        %1183 = vmatprep.subr.mxu0 0.0
        %1184 = vmatpush1.msra.mxu0 0.0
        %1185 = vmatprep.subr.mxu0 0.0
        %1186 = vmatpush1.msra.mxu0 0.0
        %1187 = vmatprep.subr.mxu0 0.0
        %1188 = vmatpush1.msra.mxu0 0.0
        %1189 = vmatprep.subr.mxu0 0.0
        %1190 = vmatpush1.msra.mxu0 0.0
        %1191 = vmatprep.subr.mxu0 0.0
        %1192 = vmatpush1.msra.mxu0 0.0
        %1193 = vmatprep.subr.mxu0 0.0
        %1194 = vmatpush1.msra.mxu0 0.0
        %1195 = vmatprep.subr.mxu0 0.0
        %1196 = vmatpush1.msra.mxu0 0.0
        %1197 = vmatprep.subr.mxu0 0.0
        %1198 = vmatpush1.msra.mxu0 0.0
        %1199 = vmatprep.subr.mxu0 0.0
        %1200 = vmatpush1.msra.mxu0 0.0
        %1201 = vmatprep.mubr.f32.mxu0 0.0
        %1202 = vmatmul.mubr.f32.gmra.mrb[0].mxu0 %v1132
        %v1203 = vpop.f32.mrb[0].mxu0
        %v1204 = vadd.f32 0.0, %v1203
        %v1205 = vpop.f32.mrb[0].mxu0
        %1206 = vmatprep.mubr.f32.mxu0 0.0
        %1207 = vmatmul.mubr.f32.gmra.mrb[0].mxu0 %v1135
        %v1208 = vpop.f32.mrb[0].mxu0
        %v1209 = vadd.f32 0.0, %v1208
        %v1210 = vpop.f32.mrb[0].mxu0
        %1211 = vdwg.mxu0
        %1214 = vrot.lane.b32.xlu0 %v1204, 64
        %v1215 = vpop.permute.xlu0 %1214
        %1216 = vrot.lane.b32.xlu0 %v1209, 64
        %v1217 = vpop.permute.xlu0 %1216
        %vm1220 = vcmask 785920
        %1221 = vst.msk [vmem:[#allocation2] sm:$0xff] %vm1220, %v1215
        %1222 = vst.msk [vmem:[#allocation2 + $0x8] sm:$0xff] %vm1220, %v1217
        %1223 = vrot.lane.b32.xlu0 %v501, 32
        %v1224 = vpop.permute.xlu0 %1223
        %1225 = vrot.lane.b32.xlu0 %v507, 32
        %v1226 = vpop.permute.xlu0 %1225
        %1227 = vrot.lane.b32.xlu0 %v503, 32
        %v1228 = vpop.permute.xlu0 %1227
        %1229 = vrot.lane.b32.xlu0 %v509, 32
        %v1230 = vpop.permute.xlu0 %1229
        %v1231 = vsel %vm587, %v1224, 0
        %v1233 = vsel %vm587, %v1226, 0
        %v1235 = vsel %vm587, %v1228, 0
        %v1237 = vsel %vm587, %v1230, 0
        %1239 = vmatprep.subr.mxu0 0.0
        %1240 = vmatpush1.xpose.msra.mxu0 %v1235
        %1241 = vmatprep.subr.mxu0 0.0
        %1242 = vmatpush1.xpose.msra.mxu0 %v1237
        %1243 = vmatprep.subr.mxu0 0.0
        %1244 = vmatpush1.xpose.msra.mxu0 0.0
        %1245 = vmatprep.subr.mxu0 0.0
        %1246 = vmatpush1.xpose.msra.mxu0 0.0
        %1247 = vmatprep.subr.mxu0 0.0
        %1248 = vmatpush1.xpose.msra.mxu0 0.0
        %1249 = vmatprep.subr.mxu0 0.0
        %1250 = vmatpush1.xpose.msra.mxu0 0.0
        %1251 = vmatprep.subr.mxu0 0.0
        %1252 = vmatpush1.xpose.msra.mxu0 0.0
        %1253 = vmatprep.subr.mxu0 0.0
        %1254 = vmatpush1.xpose.msra.mxu0 0.0
        %1255 = vmatprep.subr.mxu0 0.0
        %1256 = vmatpush1.xpose.msra.mxu0 0.0
        %1257 = vmatprep.subr.mxu0 0.0
        %1258 = vmatpush1.xpose.msra.mxu0 0.0
        %1259 = vmatprep.subr.mxu0 0.0
        %1260 = vmatpush1.xpose.msra.mxu0 0.0
        %1261 = vmatprep.subr.mxu0 0.0
        %1262 = vmatpush1.xpose.msra.mxu0 0.0
        %1263 = vmatprep.subr.mxu0 0.0
        %1264 = vmatpush1.xpose.msra.mxu0 0.0
        %1265 = vmatprep.subr.mxu0 0.0
        %1266 = vmatpush1.xpose.msra.mxu0 0.0
        %1267 = vmatprep.subr.mxu0 0.0
        %1268 = vmatpush1.xpose.msra.mxu0 0.0
        %1269 = vmatprep.subr.mxu0 0.0
        %1270 = vmatpush1.xpose.msra.mxu0 0.0
        %1271 = vmatprep.subr.mxu0 0.0
        %1272 = vmatpush1.xpose.msra.mxu0 0.0
        %1273 = vmatprep.subr.mxu0 0.0
        %1274 = vmatpush1.xpose.msra.mxu0 0.0
        %1275 = vmatprep.subr.mxu0 0.0
        %1276 = vmatpush1.xpose.msra.mxu0 0.0
        %1277 = vmatprep.subr.mxu0 0.0
        %1278 = vmatpush1.xpose.msra.mxu0 0.0
        %1279 = vmatprep.subr.mxu0 0.0
        %1280 = vmatpush1.xpose.msra.mxu0 0.0
        %1281 = vmatprep.subr.mxu0 0.0
        %1282 = vmatpush1.xpose.msra.mxu0 0.0
        %1283 = vmatprep.subr.mxu0 0.0
        %1284 = vmatpush1.xpose.msra.mxu0 0.0
        %1285 = vmatprep.subr.mxu0 0.0
        %1286 = vmatpush1.xpose.msra.mxu0 0.0
        %1287 = vmatprep.subr.mxu0 0.0
        %1288 = vmatpush1.xpose.msra.mxu0 0.0
        %1289 = vmatprep.subr.mxu0 0.0
        %1290 = vmatpush1.xpose.msra.mxu0 0.0
        %1291 = vmatprep.subr.mxu0 0.0
        %1292 = vmatpush1.xpose.msra.mxu0 0.0
        %1293 = vmatprep.subr.mxu0 0.0
        %1294 = vmatpush1.xpose.msra.mxu0 0.0
        %1295 = vmatprep.subr.mxu0 0.0
        %1296 = vmatpush1.xpose.msra.mxu0 0.0
        %1297 = vmatprep.subr.mxu0 0.0
        %1298 = vmatpush1.xpose.msra.mxu0 0.0
        %1299 = vmatprep.subr.mxu0 0.0
        %1300 = vmatpush1.xpose.msra.mxu0 0.0
        %1301 = vmatprep.subr.mxu0 0.0
        %1302 = vmatpush1.xpose.msra.mxu0 0.0
        %1303 = vmatprep.mubr.f32.mxu0 0.0
        %1304 = vmatmul.mubr.f32.gmra.mrb[0].mxu0 %v1231
        %v1305 = vpop.f32.mrb[0].mxu0
        %v1306 = vadd.f32 0.0, %v1305
        %v1307 = vpop.f32.mrb[0].mxu0
        %1308 = vmatprep.mubr.f32.mxu0 0.0
        %1309 = vmatmul.mubr.f32.gmra.mrb[0].mxu0 %v1233
        %v1310 = vpop.f32.mrb[0].mxu0
        %v1311 = vadd.f32 0.0, %v1310
        %v1312 = vpop.f32.mrb[0].mxu0
        %1313 = vdwg.mxu0
        %v1314 = vmul.f32 %v1306, 0.17677669
        %v1315 = vmul.f32 %v1311, 0.17677669
        %v1316 = vadd.f32 %v1314, %v681
        %v1317 = vadd.f32 %v1315, %v681
        %v1318 = vsel %vm685, %v1316, -inf
        %1319 = vmax.xlane.f32.xlu0 %v1318
        %v1320 = vpop.xlane.xlu0 %1319
        %v1321 = vsel %vm685, %v1317, -inf
        %1322 = vmax.xlane.f32.xlu0 %v1321
        %v1323 = vpop.xlane.xlu0 %1322
        %v1324 = vsub.f32 %v1316, %v1320
        %v1325 = vsub.f32 %v1317, %v1323
        %v1326 = vmul.f32 %v1324, 1.442695
        %v1327 = vpow.pop %v1326
        %v1328 = vmul.f32 %v1325, 1.442695
        %v1329 = vpow.pop %v1328
        %v1330 = vsel %vm685, %v1327, 0.0
        %1331 = vadd.xlane.f32.xlu0 %v1330
        %v1332 = vpop.xlane.xlu0 %1331
        %v1333 = vsel %vm685, %v1329, 0.0
        %1334 = vadd.xlane.f32.xlu0 %v1333
        %v1335 = vpop.xlane.xlu0 %1334
        %v1336 = vrcp.pop %v1332
        %v1337 = vrcp.pop %v1335
        %v1338 = vmul.f32 %v1327, %v1336
        %v1339 = vmul.f32 %v1329, %v1337
        %1340 = vrot.lane.b32.xlu0 %v578, 32
        %v1341 = vpop.permute.xlu0 %1340
        %1342 = vrot.lane.b32.xlu0 %v583, 32
        %v1343 = vpop.permute.xlu0 %1342
        %v1347 = vsel %vm685, %v1338, 0
        %v1350 = vsel %vm685, %v1339, 0
        %1352 = vmatprep.subr.mxu0 0.0
        %1353 = vmatpush1.msra.mxu0 %v1341
        %1354 = vmatprep.subr.mxu0 0.0
        %1355 = vmatpush1.msra.mxu0 %v1343
        %1356 = vmatprep.subr.mxu0 0.0
        %1357 = vmatpush1.msra.mxu0 0.0
        %1358 = vmatprep.subr.mxu0 0.0
        %1359 = vmatpush1.msra.mxu0 0.0
        %1360 = vmatprep.subr.mxu0 0.0
        %1361 = vmatpush1.msra.mxu0 0.0
        %1362 = vmatprep.subr.mxu0 0.0
        %1363 = vmatpush1.msra.mxu0 0.0
        %1364 = vmatprep.subr.mxu0 0.0
        %1365 = vmatpush1.msra.mxu0 0.0
        %1366 = vmatprep.subr.mxu0 0.0
        %1367 = vmatpush1.msra.mxu0 0.0
        %1368 = vmatprep.subr.mxu0 0.0
        %1369 = vmatpush1.msra.mxu0 0.0
        %1370 = vmatprep.subr.mxu0 0.0
        %1371 = vmatpush1.msra.mxu0 0.0
        %1372 = vmatprep.subr.mxu0 0.0
        %1373 = vmatpush1.msra.mxu0 0.0
        %1374 = vmatprep.subr.mxu0 0.0
        %1375 = vmatpush1.msra.mxu0 0.0
        %1376 = vmatprep.subr.mxu0 0.0
        %1377 = vmatpush1.msra.mxu0 0.0
        %1378 = vmatprep.subr.mxu0 0.0
        %1379 = vmatpush1.msra.mxu0 0.0
        %1380 = vmatprep.subr.mxu0 0.0
        %1381 = vmatpush1.msra.mxu0 0.0
        %1382 = vmatprep.subr.mxu0 0.0
        %1383 = vmatpush1.msra.mxu0 0.0
        %1384 = vmatprep.subr.mxu0 0.0
        %1385 = vmatpush1.msra.mxu0 0.0
        %1386 = vmatprep.subr.mxu0 0.0
        %1387 = vmatpush1.msra.mxu0 0.0
        %1388 = vmatprep.subr.mxu0 0.0
        %1389 = vmatpush1.msra.mxu0 0.0
        %1390 = vmatprep.subr.mxu0 0.0
        %1391 = vmatpush1.msra.mxu0 0.0
        %1392 = vmatprep.subr.mxu0 0.0
        %1393 = vmatpush1.msra.mxu0 0.0
        %1394 = vmatprep.subr.mxu0 0.0
        %1395 = vmatpush1.msra.mxu0 0.0
        %1396 = vmatprep.subr.mxu0 0.0
        %1397 = vmatpush1.msra.mxu0 0.0
        %1398 = vmatprep.subr.mxu0 0.0
        %1399 = vmatpush1.msra.mxu0 0.0
        %1400 = vmatprep.subr.mxu0 0.0
        %1401 = vmatpush1.msra.mxu0 0.0
        %1402 = vmatprep.subr.mxu0 0.0
        %1403 = vmatpush1.msra.mxu0 0.0
        %1404 = vmatprep.subr.mxu0 0.0
        %1405 = vmatpush1.msra.mxu0 0.0
        %1406 = vmatprep.subr.mxu0 0.0
        %1407 = vmatpush1.msra.mxu0 0.0
        %1408 = vmatprep.subr.mxu0 0.0
        %1409 = vmatpush1.msra.mxu0 0.0
        %1410 = vmatprep.subr.mxu0 0.0
        %1411 = vmatpush1.msra.mxu0 0.0
        %1412 = vmatprep.subr.mxu0 0.0
        %1413 = vmatpush1.msra.mxu0 0.0
        %1414 = vmatprep.subr.mxu0 0.0
        %1415 = vmatpush1.msra.mxu0 0.0
        %1416 = vmatprep.mubr.f32.mxu0 0.0
        %1417 = vmatmul.mubr.f32.gmra.mrb[0].mxu0 %v1347
        %v1418 = vpop.f32.mrb[0].mxu0
        %v1419 = vadd.f32 0.0, %v1418
        %v1420 = vpop.f32.mrb[0].mxu0
        %1421 = vmatprep.mubr.f32.mxu0 0.0
        %1422 = vmatmul.mubr.f32.gmra.mrb[0].mxu0 %v1350
        %v1423 = vpop.f32.mrb[0].mxu0
        %v1424 = vadd.f32 0.0, %v1423
        %v1425 = vpop.f32.mrb[0].mxu0
        %1426 = vdwg.mxu0
        %1429 = vrot.lane.b32.xlu0 %v1419, 96
        %v1430 = vpop.permute.xlu0 %1429
        %1431 = vrot.lane.b32.xlu0 %v1424, 96
        %v1432 = vpop.permute.xlu0 %1431
        %vm1435 = vcmask 1048320
        %1436 = vst.msk [vmem:[#allocation2] sm:$0xff] %vm1435, %v1430
        %1437 = vst.msk [vmem:[#allocation2 + $0x8] sm:$0xff] %vm1435, %v1432
        %v1438 = vld [vmem:[#allocation2] sm:$0xff]
        %v1439 = vld [vmem:[#allocation2 + $0x8] sm:$0xff]
        %v1440 = vld [vmem:[#allocation8] sm:$0xff]
        %v1441 = vld [vmem:[#allocation8 + $0x8] sm:$0xff]
        %v1442 = vld [vmem:[#allocation8 + $0x10] sm:$0xff]
        %v1443 = vld [vmem:[#allocation8 + $0x18] sm:$0xff]
        %v1444 = vld [vmem:[#allocation8 + $0x20] sm:$0xff]
        %v1445 = vld [vmem:[#allocation8 + $0x28] sm:$0xff]
        %v1446 = vld [vmem:[#allocation8 + $0x30] sm:$0xff]
        %v1447 = vld [vmem:[#allocation8 + $0x38] sm:$0xff]
        %v1448 = vld [vmem:[#allocation8 + $0x40] sm:$0xff]
        %v1449 = vld [vmem:[#allocation8 + $0x48] sm:$0xff]
        %v1450 = vld [vmem:[#allocation8 + $0x50] sm:$0xff]
        %v1451 = vld [vmem:[#allocation8 + $0x58] sm:$0xff]
        %v1452 = vld [vmem:[#allocation8 + $0x60] sm:$0xff]
        %v1453 = vld [vmem:[#allocation8 + $0x68] sm:$0xff]
        %v1454 = vld [vmem:[#allocation8 + $0x70] sm:$0xff]
        %v1455 = vld [vmem:[#allocation8 + $0x78] sm:$0xff]
        %v1456 = vld [vmem:[%s5] sm:$0x1]
        %v1458 = vlaneseq
        %v1459 = vshrl.u32 %v1458, 7
        %v1460 = vsub.s32 0, %v1459
        %v1461 = vrot.slane %v1456, %v1460
        %1463 = vmatprep.subr.mxu0 0.0
        %1464 = vmatpush1.msra.mxu0 %v1440
        %1465 = vmatprep.subr.mxu0 0.0
        %1466 = vmatpush1.msra.mxu0 %v1441
        %1467 = vmatprep.subr.mxu0 0.0
        %1468 = vmatpush1.msra.mxu0 %v1442
        %1469 = vmatprep.subr.mxu0 0.0
        %1470 = vmatpush1.msra.mxu0 %v1443
        %1471 = vmatprep.subr.mxu0 0.0
        %1472 = vmatpush1.msra.mxu0 %v1444
        %1473 = vmatprep.subr.mxu0 0.0
        %1474 = vmatpush1.msra.mxu0 %v1445
        %1475 = vmatprep.subr.mxu0 0.0
        %1476 = vmatpush1.msra.mxu0 %v1446
        %1477 = vmatprep.subr.mxu0 0.0
        %1478 = vmatpush1.msra.mxu0 %v1447
        %1479 = vmatprep.subr.mxu0 0.0
        %1480 = vmatpush1.msra.mxu0 %v1448
        %1481 = vmatprep.subr.mxu0 0.0
        %1482 = vmatpush1.msra.mxu0 %v1449
        %1483 = vmatprep.subr.mxu0 0.0
        %1484 = vmatpush1.msra.mxu0 %v1450
        %1485 = vmatprep.subr.mxu0 0.0
        %1486 = vmatpush1.msra.mxu0 %v1451
        %1487 = vmatprep.subr.mxu0 0.0
        %1488 = vmatpush1.msra.mxu0 %v1452
        %1489 = vmatprep.subr.mxu0 0.0
        %1490 = vmatpush1.msra.mxu0 %v1453
        %1491 = vmatprep.subr.mxu0 0.0
        %1492 = vmatpush1.msra.mxu0 %v1454
        %1493 = vmatprep.subr.mxu0 0.0
        %1494 = vmatpush1.msra.mxu0 %v1455
        %1495 = vmatprep.subr.mxu0 0.0
        %1496 = vmatpush1.msra.mxu0 0.0
        %1497 = vmatprep.subr.mxu0 0.0
        %1498 = vmatpush1.msra.mxu0 0.0
        %1499 = vmatprep.subr.mxu0 0.0
        %1500 = vmatpush1.msra.mxu0 0.0
        %1501 = vmatprep.subr.mxu0 0.0
        %1502 = vmatpush1.msra.mxu0 0.0
        %1503 = vmatprep.subr.mxu0 0.0
        %1504 = vmatpush1.msra.mxu0 0.0
        %1505 = vmatprep.subr.mxu0 0.0
        %1506 = vmatpush1.msra.mxu0 0.0
        %1507 = vmatprep.subr.mxu0 0.0
        %1508 = vmatpush1.msra.mxu0 0.0
        %1509 = vmatprep.subr.mxu0 0.0
        %1510 = vmatpush1.msra.mxu0 0.0
        %1511 = vmatprep.subr.mxu0 0.0
        %1512 = vmatpush1.msra.mxu0 0.0
        %1513 = vmatprep.subr.mxu0 0.0
        %1514 = vmatpush1.msra.mxu0 0.0
        %1515 = vmatprep.subr.mxu0 0.0
        %1516 = vmatpush1.msra.mxu0 0.0
        %1517 = vmatprep.subr.mxu0 0.0
        %1518 = vmatpush1.msra.mxu0 0.0
        %1519 = vmatprep.subr.mxu0 0.0
        %1520 = vmatpush1.msra.mxu0 0.0
        %1521 = vmatprep.subr.mxu0 0.0
        %1522 = vmatpush1.msra.mxu0 0.0
        %1523 = vmatprep.subr.mxu0 0.0
        %1524 = vmatpush1.msra.mxu0 0.0
        %1525 = vmatprep.subr.mxu0 0.0
        %1526 = vmatpush1.msra.mxu0 0.0
        %1527 = vmatprep.mubr.f32.mxu0 0.0
        %1528 = vmatmul.mubr.f32.gmra.mrb[0].mxu0 %v1438
        %v1529 = vpop.f32.mrb[0].mxu0
        %v1530 = vadd.f32 %v1461, %v1529
        %v1531 = vpop.f32.mrb[0].mxu0
        %1532 = vmatprep.mubr.f32.mxu0 0.0
        %1533 = vmatmul.mubr.f32.gmra.mrb[0].mxu0 %v1439
        %v1534 = vpop.f32.mrb[0].mxu0
        %v1535 = vadd.f32 %v1461, %v1534
        %v1536 = vpop.f32.mrb[0].mxu0
        %1537 = vdwg.mxu0
        %v1538 = vadd.f32 %v367, %v1530
        %v1539 = vadd.f32 %v368, %v1535
        %1540 = vadd.xlane.f32.xlu0 %v1538
        %v1541 = vpop.xlane.xlu0 %1540
        %1542 = vadd.xlane.f32.xlu0 %v1539
        %v1543 = vpop.xlane.xlu0 %1542
        %v1544 = vrcp.pop 128.0
        %v1545 = vmul.f32 %v1541, %v1544
        %v1546 = vmul.f32 %v1543, %v1544
        %v1547 = vsub.f32 %v1538, %v1545
        %v1548 = vsub.f32 %v1539, %v1546
        %v1549 = vmul.f32 %v1547, %v1547
        %v1550 = vmul.f32 %v1548, %v1548
        %1551 = vadd.xlane.f32.xlu0 %v1549
        %v1552 = vpop.xlane.xlu0 %1551
        %1553 = vadd.xlane.f32.xlu0 %v1550
        %v1554 = vpop.xlane.xlu0 %1553
        %v1555 = vmul.f32 %v1552, %v1544
        %v1556 = vmul.f32 %v1554, %v1544
        %v1557 = vadd.f32 %v1555, 1e-05
        %v1558 = vadd.f32 %v1556, 1e-05
        %v1559 = vrsqrt.pop %v1557
        %v1560 = vrsqrt.pop %v1558
        %v1561 = vmul.f32 %v1547, %v1559
        %v1562 = vmul.f32 %v1548, %v1560
        %v1563 = vld [vmem:[%s6] sm:$0x1]
        %v1565 = vlaneseq
        %v1566 = vshrl.u32 %v1565, 7
        %v1567 = vsub.s32 0, %v1566
        %v1568 = vrot.slane %v1563, %v1567
        %v1570 = vmul.f32 %v1561, %v1568
        %v1571 = vmul.f32 %v1562, %v1568
        %v1572 = vld [vmem:[%s7] sm:$0x1]
        %v1574 = vlaneseq
        %v1575 = vshrl.u32 %v1574, 7
        %v1576 = vsub.s32 0, %v1575
        %v1577 = vrot.slane %v1572, %v1576
        %v1579 = vadd.f32 %v1570, %v1577
        %v1580 = vadd.f32 %v1571, %v1577
        %1581 = vst [vmem:[%s363] sm:$0xff] %v1579
        %1582 = vst [vmem:[%s363 + $0x8] sm:$0xff] %v1580
        %s1583 = sand.u32 %s212, 1
        %s1584 = scalar_lea.sflag [#allocation5], %s1583
        %s1585 = sand.u32 %s212, 1
        %s1586 = smul.addr %s1585, 16
        %s1587 = scalar_lea.vmem [#allocation9], %s1586
        // Predicated region
        $region65: #{tpu_custom_call.1} parent=51 // pred_check
          %p1588 = pneg %p222
        $region66: #{tpu_custom_call.1} parent=51 // pred_check_branch
          %1590 = sbr.rel (%p1588) target = $region68
        $region67: #{tpu_custom_call.1} parent=51 // pred_region
          %s1592 = ssub.s32 256, 256
          %1593 = vsyncadd %s1584, %s1592
          %s1594 = smul.addr %s26, 2
          %s1595 = smul.addr %s1594, 128
          %s1596 = scalar_lea.hbm %s8, %s1595
          %s1597 = sshll.u32 %s1587, 4
          %s1598 = int_to_ptr.vmem [resolvable:$true] %s1597
          %1603 = dma.vmem_to_hbm [thread:$0]  %s1598, 256, %s1596, %s1584, 128, 128, 8
        $region68: #{tpu_custom_call.1} parent=51 // pred_fallthru
          _
      $region52: #{tpu_custom_call.1} parent=5 // pred_fallthru
        _
      %p1604 = scmp.le.s32.totalorder 2, %s21
      // Predicated region
      $region69: #{tpu_custom_call.1} parent=5 // pred_check
        %p1605 = pneg %p1604
      $region70: #{tpu_custom_call.1} parent=5 // pred_check_branch
        %1607 = sbr.rel (%p1605) target = $region72
      $region71: #{tpu_custom_call.1} parent=5 // pred_region
        %s1608 = ssub.s32 %s21, 2
        // Predicated region
        $region73: #{tpu_custom_call.1} parent=71 // pred_check
          %p1609 = pneg %p228
        $region74: #{tpu_custom_call.1} parent=71 // pred_check_branch
          %1611 = sbr.rel (%p1609) target = $region76
        $region75: #{tpu_custom_call.1} parent=71 // pred_region
          %s1612 = sand.u32 %s213, 1
          %s1613 = scalar_lea.sflag [#allocation5], %s1612
          %s1614 = sand.u32 %s213, 1
          %s1615 = smul.addr %s1614, 16
          %s1616 = scalar_lea.vmem [#allocation9], %s1615
          %1617 = dma.done %s1613, 256
        $region76: #{tpu_custom_call.1} parent=71 // pred_fallthru
          _
      $region72: #{tpu_custom_call.1} parent=5 // pred_fallthru
        _
    $region6: #{tpu_custom_call.1} parent=1 // loop_footer
      %s25 = sadd.s32 1, %s21
    $region7: #{tpu_custom_call.1} parent=1 // loop_footer_branch
      %20 = sbr.rel target = $region3
    $region8: #{tpu_custom_call.1} parent=1 // loop_exit
      _
    %1618 = vsyncpa [#allocation4], 1
    %s1619 = scalar_lea.sflag [#allocation4], 1
    %1620 = vsyncpa %s1619, 1
    %1621 = vsyncpa [#allocation7], 1
    %1622 = vsyncpa [#allocation5], 1
    %s1623 = scalar_lea.sflag [#allocation5], 1
    %1624 = vsyncpa %s1623, 1

</llo_original>
